<compile_context>
chip_gen: v7x
topology: tpu7x:2x2x1
jax: 0.10.0
libtpu: 0.0.40
codegen_flags: <defaults>
</compile_context>

<pallas_src>
import functools

import jax
import jax.numpy as jnp
from jax import lax
from jax.experimental import pallas as pl
from jax.experimental.pallas import tpu as pltpu

IN_DIM = 9    # encoder input / decoder output width
MID_DIM = 6   # hidden width of both encoder and decoder
LANE = 128    # TPU lane width
CHUNK = 8     # sublanes per inner chunk (one f32 vreg row per feature)


def _param_offsets(latent):
    """Offsets into the single flat packed parameter vector."""
    off = {}
    cur = 0

    def add(name, n):
        nonlocal cur
        off[name] = cur
        cur += n

    add("w1", IN_DIM * MID_DIM)      # [9, 6]   row-major
    add("b1", MID_DIM)
    add("w4", MID_DIM * latent)      # [6, L]
    add("b4", latent)
    add("w5", MID_DIM * latent)      # [6, L]
    add("b5", latent)
    add("wd1", latent * MID_DIM)     # [L, 6]
    add("bd1", MID_DIM)
    add("wd4", MID_DIM * IN_DIM)     # [6, 9]
    add("bd4", IN_DIM)
    return off, cur


def vae_kernel(p_ref, x_ref, noise_ref, out_ref, *, latent, chunk, num_chunks):
    """Chunked VPU/EUP forward pass on a [*, tile_s, 128] batch tile.

    p_ref     : SMEM [P]                  packed weights/biases (f32 scalars)
    x_ref     : VMEM [9,  tile_s, 128]    input, batch on (sublane, lane)
    noise_ref : VMEM [L,  tile_s, 128]    N(0,1) samples
    out_ref   : VMEM [2L+9, tile_s, 128]  rows = [z_mean | z_log_var | recon]

    The tile is processed in `num_chunks` chunks of `chunk` sublanes so that
    intermediates stay register-resident (no vreg spills at large tiles).
    """
    off, _ = _param_offsets(latent)

    def load(name, n):
        base = off[name]
        return [p_ref[base + i] for i in range(n)]

    # Hoist all scalar parameter reads above the chunk loop.
    w1, b1 = load("w1", IN_DIM * MID_DIM), load("b1", MID_DIM)
    w4, b4 = load("w4", MID_DIM * latent), load("b4", latent)
    w5, b5 = load("w5", MID_DIM * latent), load("b5", latent)
    wd1, bd1 = load("wd1", latent * MID_DIM), load("bd1", MID_DIM)
    wd4, bd4 = load("wd4", MID_DIM * IN_DIM), load("bd4", IN_DIM)

    def process_chunk(sl):
        # Input feature rows for this chunk: each a [chunk, 128] slab.
        x = [x_ref[k, sl, :] for k in range(IN_DIM)]

        # --- encoder layer 1: h_j = tanh(sum_k W1[k,j] * x_k + b1[j]) ---
        h = []
        for j in range(MID_DIM):
            acc = w1[j] * x[0]
            for k in range(1, IN_DIM):
                acc = acc + w1[k * MID_DIM + j] * x[k]
            h.append(jnp.tanh(acc + b1[j]))

        # --- fused z_mean / z_log_var heads + reparameterization ---
        z = []
        for m in range(latent):
            zm = w4[m] * h[0]
            zv = w5[m] * h[0]
            for j in range(1, MID_DIM):
                zm = zm + w4[j * latent + m] * h[j]
                zv = zv + w5[j * latent + m] * h[j]
            zm = zm + b4[m]
            zv = jnp.exp(zv + b5[m])             # matches torch.exp(linear5(h))
            out_ref[m, sl, :] = zm               # z_mean row (dense store)
            out_ref[latent + m, sl, :] = zv      # z_log_var row (dense store)
            z.append(zm + zv * noise_ref[m, sl, :])   # z = mean + "var" * eps

        # --- decoder layer 1: hd_j = tanh(sum_m Wd1[m,j] * z_m + bd1[j]) ---
        hd = []
        for j in range(MID_DIM):
            acc = wd1[j] * z[0]
            for m in range(1, latent):
                acc = acc + wd1[m * MID_DIM + j] * z[m]
            hd.append(jnp.tanh(acc + bd1[j]))

        # --- decoder output: recon_i = sum_j Wd4[j,i] * hd_j + bd4[i] ---
        for i in range(IN_DIM):
            acc = wd4[i] * hd[0]
            for j in range(1, MID_DIM):
                acc = acc + wd4[j * IN_DIM + i] * hd[j]
            out_ref[2 * latent + i, sl, :] = acc + bd4[i]

    if num_chunks == 1:
        process_chunk(pl.ds(0, chunk))
    else:
        def body(c, carry):
            start = pl.multiple_of(c * chunk, chunk)
            process_chunk(pl.ds(start, chunk))
            return carry
        lax.fori_loop(0, num_chunks, body, 0)


def pack_params(params, latent):
    """Pack all weights/biases (row-major) into one flat f32 vector for SMEM."""
    _, total = _param_offsets(latent)
    flat = jnp.concatenate([
        params["w1"].reshape(-1), params["b1"].reshape(-1),
        params["w4"].reshape(-1), params["b4"].reshape(-1),
        params["w5"].reshape(-1), params["b5"].reshape(-1),
        params["wd1"].reshape(-1), params["bd1"].reshape(-1),
        params["wd4"].reshape(-1), params["bd4"].reshape(-1),
    ]).astype(jnp.float32)
    assert flat.shape[0] == total
    return flat


def _tile_plan(s0, tile_lanes):
    """Choose (tile_s, chunk) for s0 lane-rows of batch.

    - tile_s is a multiple of CHUNK (so blocks satisfy the (8,128) rule and the
      in-kernel chunk loop divides evenly), except for tiny batches where it is
      the full (sub-8) extent.
    - For batches that allow it, tile_s is capped at ~half the rows so the
      parallel grid has >= 2 steps (both v7x TensorCores get work).
    """
    tile_s = max(1, min(tile_lanes, s0))
    if s0 >= CHUNK:
        tile_s = max(CHUNK, (tile_s // CHUNK) * CHUNK)
        if s0 >= 2 * CHUNK:
            half = (((s0 + 1) // 2) + CHUNK - 1) // CHUNK * CHUNK
            tile_s = min(tile_s, half)
        chunk = CHUNK
    else:
        tile_s = s0          # tiny batch: one partial-vreg tile == full array
        chunk = tile_s
    return tile_s, chunk


def vae_forward(x, noise, params, *, tile_lanes=128):
    """x: [B, 9] f32, noise: [B, latent] f32, params: dict of weights.

    Returns (z_mean [B, L], z_log_var [B, L], reconstruction [B, 9]).
    tile_lanes * 128 batch rows are processed per grid step (default 128 ->
    16384 rows/step, amortizing per-step overhead; capped for small batches).
    """
    B = x.shape[0]
    latent = noise.shape[1]
    p_flat = pack_params(params, latent)

    # --- batch-on-lanes layout: [features, S_total, 128] ---
    s0 = -(-B // LANE)                              # lane-rows needed
    tile_s, chunk = _tile_plan(s0, tile_lanes)
    num_chunks = tile_s // chunk
    s_total = -(-s0 // tile_s) * tile_s
    b_pad = s_total * LANE

    def to_lanes(a):                                # [B, F] -> [F, S, 128]
        # Single transpose+pad+reshape pass (fuses into one XLA copy).
        a_t = jnp.pad(a.T.astype(jnp.float32), ((0, 0), (0, b_pad - B)))
        return a_t.reshape(a.shape[1], s_total, LANE)

    x_l = to_lanes(x)                               # [9, S, 128]
    n_l = to_lanes(noise)                           # [L, S, 128]

    out_rows = 2 * latent + IN_DIM                  # fused output rows
    grid = (s_total // tile_s,)

    out = pl.pallas_call(
        functools.partial(vae_kernel, latent=latent, chunk=chunk,
                          num_chunks=num_chunks),
        out_shape=jax.ShapeDtypeStruct((out_rows, s_total, LANE), jnp.float32),
        grid_spec=pltpu.PrefetchScalarGridSpec(
            num_scalar_prefetch=0,
            grid=grid,
            in_specs=[
                # packed params: whole vector, scalar memory
                pl.BlockSpec(memory_space=pltpu.MemorySpace.SMEM),
                pl.BlockSpec((IN_DIM, tile_s, LANE), lambda i: (0, i, 0)),
                pl.BlockSpec((latent, tile_s, LANE), lambda i: (0, i, 0)),
            ],
            out_specs=pl.BlockSpec((out_rows, tile_s, LANE),
                                   lambda i: (0, i, 0)),
        ),
        compiler_params=pltpu.CompilerParams(
            dimension_semantics=("parallel",)),
    )(p_flat, x_l, n_l)

    # ONE layout pass back to batch-major; column slices below are cheap.
    flat = out.transpose(1, 2, 0).reshape(b_pad, out_rows)[:B]
    z_mean = flat[:, :latent]
    z_log_var = flat[:, latent:2 * latent]
    recon = flat[:, 2 * latent:]
    return z_mean, z_log_var, recon


def init_params(key, latent_dims):
    """Deterministic init mimicking nn.Linear default (uniform +/- 1/sqrt(fan_in))."""
    def linear(k, fan_in, fan_out):
        kw, kb = jax.random.split(k)
        bound = 1.0 / (fan_in ** 0.5)
        w = jax.random.uniform(kw, (fan_in, fan_out), jnp.float32, -bound, bound)
        b = jax.random.uniform(kb, (1, fan_out), jnp.float32, -bound, bound)
        return w, b

    k1, k2, k3, k4, k5 = jax.random.split(key, 5)
    w1, b1 = linear(k1, IN_DIM, MID_DIM)         # encoder.linear1
    w4, b4 = linear(k2, MID_DIM, latent_dims)    # encoder.linear4 (z_mean)
    w5, b5 = linear(k3, MID_DIM, latent_dims)    # encoder.linear5 (z_log_var)
    wd1, bd1 = linear(k4, latent_dims, MID_DIM)  # decoder.linear1
    wd4, bd4 = linear(k5, MID_DIM, IN_DIM)       # decoder.linear4
    return dict(w1=w1, b1=b1, w4=w4, b4=b4, w5=w5, b5=b5,
                wd1=wd1, bd1=bd1, wd4=wd4, bd4=bd4)


def _reference(x, noise, params):
    h = jnp.tanh(x @ params["w1"] + params["b1"])
    zm = h @ params["w4"] + params["b4"]
    zlv = jnp.exp(h @ params["w5"] + params["b5"])
    z = zm + zlv * noise
    hd = jnp.tanh(z @ params["wd1"] + params["bd1"])
    rec = hd @ params["wd4"] + params["bd4"]
    return zm, zlv, rec


def _check(B, latent_dims, params, key):
    kx, kn = jax.random.split(key)
    x = jax.random.normal(kx, (B, IN_DIM), dtype=jnp.float32)
    noise = jax.random.normal(kn, (B, latent_dims), dtype=jnp.float32)
    outs = vae_forward(x, noise, params)
    jax.block_until_ready(outs)
    refs = _reference(x, noise, params)
    for got, want in zip(outs, refs):
        assert jnp.allclose(got, want, atol=1e-4, rtol=1e-4)


if __name__ == "__main__":
    latent_dims = 3

    key = jax.random.PRNGKey(0)
    k_params, k_a, k_b, k_c = jax.random.split(key, 4)
    params = init_params(k_params, latent_dims)

    # Small batch: exercises the B < 128 single-partial-tile path.
    _check(8, latent_dims, params, k_a)

    # Mid batch: 2-step parallel grid, multi-chunk (num_chunks=3) inner loop.
    _check(5120, latent_dims, params, k_b)

    # Large batch: full 128-lane-row tiles, 16-chunk rolled inner loop, 3 steps.
    _check(49152, latent_dims, params, k_c)

    print("KERNEL_OK")
</pallas_src>

<mosaic_0001>
module attributes {stable_mosaic.version = 11 : i64} {
  func.func @vae_kernel(%arg0: i32, %arg1: memref<189xf32, #tpu.memory_space<smem>>, %arg2: memref<9x1x128xf32, #tpu.memory_space<vmem>>, %arg3: memref<3x1x128xf32, #tpu.memory_space<vmem>>, %arg4: memref<15x1x128xf32, #tpu.memory_space<vmem>>) attributes {dimension_semantics = [#tpu.dimension_semantics<parallel>], iteration_bounds = array<i64: 1>, scalar_prefetch = 0 : i64, scratch_operands = 0 : i64, tpu.core_type = #tpu.core_type<tc>, window_params = [{transform_indices = @transform_0, window_bounds = array<i64: 189>}, {transform_indices = @transform_1, window_bounds = array<i64: 9, 1, 128>}, {transform_indices = @transform_2, window_bounds = array<i64: 3, 1, 128>}, {transform_indices = @transform_3, window_bounds = array<i64: 15, 1, 128>}]} {
    %c0 = arith.constant 0 : index
    %0 = memref.load %arg1[%c0] : memref<189xf32, #tpu.memory_space<smem>>
    %c1 = arith.constant 1 : index
    %1 = memref.load %arg1[%c1] : memref<189xf32, #tpu.memory_space<smem>>
    %c2 = arith.constant 2 : index
    %2 = memref.load %arg1[%c2] : memref<189xf32, #tpu.memory_space<smem>>
    %c3 = arith.constant 3 : index
    %3 = memref.load %arg1[%c3] : memref<189xf32, #tpu.memory_space<smem>>
    %c4 = arith.constant 4 : index
    %4 = memref.load %arg1[%c4] : memref<189xf32, #tpu.memory_space<smem>>
    %c5 = arith.constant 5 : index
    %5 = memref.load %arg1[%c5] : memref<189xf32, #tpu.memory_space<smem>>
    %c6 = arith.constant 6 : index
    %6 = memref.load %arg1[%c6] : memref<189xf32, #tpu.memory_space<smem>>
    %c7 = arith.constant 7 : index
    %7 = memref.load %arg1[%c7] : memref<189xf32, #tpu.memory_space<smem>>
    %c8 = arith.constant 8 : index
    %8 = memref.load %arg1[%c8] : memref<189xf32, #tpu.memory_space<smem>>
    %c9 = arith.constant 9 : index
    %9 = memref.load %arg1[%c9] : memref<189xf32, #tpu.memory_space<smem>>
    %c10 = arith.constant 10 : index
    %10 = memref.load %arg1[%c10] : memref<189xf32, #tpu.memory_space<smem>>
    %c11 = arith.constant 11 : index
    %11 = memref.load %arg1[%c11] : memref<189xf32, #tpu.memory_space<smem>>
    %c12 = arith.constant 12 : index
    %12 = memref.load %arg1[%c12] : memref<189xf32, #tpu.memory_space<smem>>
    %c13 = arith.constant 13 : index
    %13 = memref.load %arg1[%c13] : memref<189xf32, #tpu.memory_space<smem>>
    %c14 = arith.constant 14 : index
    %14 = memref.load %arg1[%c14] : memref<189xf32, #tpu.memory_space<smem>>
    %c15 = arith.constant 15 : index
    %15 = memref.load %arg1[%c15] : memref<189xf32, #tpu.memory_space<smem>>
    %c16 = arith.constant 16 : index
    %16 = memref.load %arg1[%c16] : memref<189xf32, #tpu.memory_space<smem>>
    %c17 = arith.constant 17 : index
    %17 = memref.load %arg1[%c17] : memref<189xf32, #tpu.memory_space<smem>>
    %c18 = arith.constant 18 : index
    %18 = memref.load %arg1[%c18] : memref<189xf32, #tpu.memory_space<smem>>
    %c19 = arith.constant 19 : index
    %19 = memref.load %arg1[%c19] : memref<189xf32, #tpu.memory_space<smem>>
    %c20 = arith.constant 20 : index
    %20 = memref.load %arg1[%c20] : memref<189xf32, #tpu.memory_space<smem>>
    %c21 = arith.constant 21 : index
    %21 = memref.load %arg1[%c21] : memref<189xf32, #tpu.memory_space<smem>>
    %c22 = arith.constant 22 : index
    %22 = memref.load %arg1[%c22] : memref<189xf32, #tpu.memory_space<smem>>
    %c23 = arith.constant 23 : index
    %23 = memref.load %arg1[%c23] : memref<189xf32, #tpu.memory_space<smem>>
    %c24 = arith.constant 24 : index
    %24 = memref.load %arg1[%c24] : memref<189xf32, #tpu.memory_space<smem>>
    %c25 = arith.constant 25 : index
    %25 = memref.load %arg1[%c25] : memref<189xf32, #tpu.memory_space<smem>>
    %c26 = arith.constant 26 : index
    %26 = memref.load %arg1[%c26] : memref<189xf32, #tpu.memory_space<smem>>
    %c27 = arith.constant 27 : index
    %27 = memref.load %arg1[%c27] : memref<189xf32, #tpu.memory_space<smem>>
    %c28 = arith.constant 28 : index
    %28 = memref.load %arg1[%c28] : memref<189xf32, #tpu.memory_space<smem>>
    %c29 = arith.constant 29 : index
    %29 = memref.load %arg1[%c29] : memref<189xf32, #tpu.memory_space<smem>>
    %c30 = arith.constant 30 : index
    %30 = memref.load %arg1[%c30] : memref<189xf32, #tpu.memory_space<smem>>
    %c31 = arith.constant 31 : index
    %31 = memref.load %arg1[%c31] : memref<189xf32, #tpu.memory_space<smem>>
    %c32 = arith.constant 32 : index
    %32 = memref.load %arg1[%c32] : memref<189xf32, #tpu.memory_space<smem>>
    %c33 = arith.constant 33 : index
    %33 = memref.load %arg1[%c33] : memref<189xf32, #tpu.memory_space<smem>>
    %c34 = arith.constant 34 : index
    %34 = memref.load %arg1[%c34] : memref<189xf32, #tpu.memory_space<smem>>
    %c35 = arith.constant 35 : index
    %35 = memref.load %arg1[%c35] : memref<189xf32, #tpu.memory_space<smem>>
    %c36 = arith.constant 36 : index
    %36 = memref.load %arg1[%c36] : memref<189xf32, #tpu.memory_space<smem>>
    %c37 = arith.constant 37 : index
    %37 = memref.load %arg1[%c37] : memref<189xf32, #tpu.memory_space<smem>>
    %c38 = arith.constant 38 : index
    %38 = memref.load %arg1[%c38] : memref<189xf32, #tpu.memory_space<smem>>
    %c39 = arith.constant 39 : index
    %39 = memref.load %arg1[%c39] : memref<189xf32, #tpu.memory_space<smem>>
    %c40 = arith.constant 40 : index
    %40 = memref.load %arg1[%c40] : memref<189xf32, #tpu.memory_space<smem>>
    %c41 = arith.constant 41 : index
    %41 = memref.load %arg1[%c41] : memref<189xf32, #tpu.memory_space<smem>>
    %c42 = arith.constant 42 : index
    %42 = memref.load %arg1[%c42] : memref<189xf32, #tpu.memory_space<smem>>
    %c43 = arith.constant 43 : index
    %43 = memref.load %arg1[%c43] : memref<189xf32, #tpu.memory_space<smem>>
    %c44 = arith.constant 44 : index
    %44 = memref.load %arg1[%c44] : memref<189xf32, #tpu.memory_space<smem>>
    %c45 = arith.constant 45 : index
    %45 = memref.load %arg1[%c45] : memref<189xf32, #tpu.memory_space<smem>>
    %c46 = arith.constant 46 : index
    %46 = memref.load %arg1[%c46] : memref<189xf32, #tpu.memory_space<smem>>
    %c47 = arith.constant 47 : index
    %47 = memref.load %arg1[%c47] : memref<189xf32, #tpu.memory_space<smem>>
    %c48 = arith.constant 48 : index
    %48 = memref.load %arg1[%c48] : memref<189xf32, #tpu.memory_space<smem>>
    %c49 = arith.constant 49 : index
    %49 = memref.load %arg1[%c49] : memref<189xf32, #tpu.memory_space<smem>>
    %c50 = arith.constant 50 : index
    %50 = memref.load %arg1[%c50] : memref<189xf32, #tpu.memory_space<smem>>
    %c51 = arith.constant 51 : index
    %51 = memref.load %arg1[%c51] : memref<189xf32, #tpu.memory_space<smem>>
    %c52 = arith.constant 52 : index
    %52 = memref.load %arg1[%c52] : memref<189xf32, #tpu.memory_space<smem>>
    %c53 = arith.constant 53 : index
    %53 = memref.load %arg1[%c53] : memref<189xf32, #tpu.memory_space<smem>>
    %c54 = arith.constant 54 : index
    %54 = memref.load %arg1[%c54] : memref<189xf32, #tpu.memory_space<smem>>
    %c55 = arith.constant 55 : index
    %55 = memref.load %arg1[%c55] : memref<189xf32, #tpu.memory_space<smem>>
    %c56 = arith.constant 56 : index
    %56 = memref.load %arg1[%c56] : memref<189xf32, #tpu.memory_space<smem>>
    %c57 = arith.constant 57 : index
    %57 = memref.load %arg1[%c57] : memref<189xf32, #tpu.memory_space<smem>>
    %c58 = arith.constant 58 : index
    %58 = memref.load %arg1[%c58] : memref<189xf32, #tpu.memory_space<smem>>
    %c59 = arith.constant 59 : index
    %59 = memref.load %arg1[%c59] : memref<189xf32, #tpu.memory_space<smem>>
    %c60 = arith.constant 60 : index
    %60 = memref.load %arg1[%c60] : memref<189xf32, #tpu.memory_space<smem>>
    %c61 = arith.constant 61 : index
    %61 = memref.load %arg1[%c61] : memref<189xf32, #tpu.memory_space<smem>>
    %c62 = arith.constant 62 : index
    %62 = memref.load %arg1[%c62] : memref<189xf32, #tpu.memory_space<smem>>
    %c63 = arith.constant 63 : index
    %63 = memref.load %arg1[%c63] : memref<189xf32, #tpu.memory_space<smem>>
    %c64 = arith.constant 64 : index
    %64 = memref.load %arg1[%c64] : memref<189xf32, #tpu.memory_space<smem>>
    %c65 = arith.constant 65 : index
    %65 = memref.load %arg1[%c65] : memref<189xf32, #tpu.memory_space<smem>>
    %c66 = arith.constant 66 : index
    %66 = memref.load %arg1[%c66] : memref<189xf32, #tpu.memory_space<smem>>
    %c67 = arith.constant 67 : index
    %67 = memref.load %arg1[%c67] : memref<189xf32, #tpu.memory_space<smem>>
    %c68 = arith.constant 68 : index
    %68 = memref.load %arg1[%c68] : memref<189xf32, #tpu.memory_space<smem>>
    %c69 = arith.constant 69 : index
    %69 = memref.load %arg1[%c69] : memref<189xf32, #tpu.memory_space<smem>>
    %c70 = arith.constant 70 : index
    %70 = memref.load %arg1[%c70] : memref<189xf32, #tpu.memory_space<smem>>
    %c71 = arith.constant 71 : index
    %71 = memref.load %arg1[%c71] : memref<189xf32, #tpu.memory_space<smem>>
    %c72 = arith.constant 72 : index
    %72 = memref.load %arg1[%c72] : memref<189xf32, #tpu.memory_space<smem>>
    %c73 = arith.constant 73 : index
    %73 = memref.load %arg1[%c73] : memref<189xf32, #tpu.memory_space<smem>>
    %c74 = arith.constant 74 : index
    %74 = memref.load %arg1[%c74] : memref<189xf32, #tpu.memory_space<smem>>
    %c75 = arith.constant 75 : index
    %75 = memref.load %arg1[%c75] : memref<189xf32, #tpu.memory_space<smem>>
    %c76 = arith.constant 76 : index
    %76 = memref.load %arg1[%c76] : memref<189xf32, #tpu.memory_space<smem>>
    %c77 = arith.constant 77 : index
    %77 = memref.load %arg1[%c77] : memref<189xf32, #tpu.memory_space<smem>>
    %c78 = arith.constant 78 : index
    %78 = memref.load %arg1[%c78] : memref<189xf32, #tpu.memory_space<smem>>
    %c79 = arith.constant 79 : index
    %79 = memref.load %arg1[%c79] : memref<189xf32, #tpu.memory_space<smem>>
    %c80 = arith.constant 80 : index
    %80 = memref.load %arg1[%c80] : memref<189xf32, #tpu.memory_space<smem>>
    %c81 = arith.constant 81 : index
    %81 = memref.load %arg1[%c81] : memref<189xf32, #tpu.memory_space<smem>>
    %c82 = arith.constant 82 : index
    %82 = memref.load %arg1[%c82] : memref<189xf32, #tpu.memory_space<smem>>
    %c83 = arith.constant 83 : index
    %83 = memref.load %arg1[%c83] : memref<189xf32, #tpu.memory_space<smem>>
    %c84 = arith.constant 84 : index
    %84 = memref.load %arg1[%c84] : memref<189xf32, #tpu.memory_space<smem>>
    %c85 = arith.constant 85 : index
    %85 = memref.load %arg1[%c85] : memref<189xf32, #tpu.memory_space<smem>>
    %c86 = arith.constant 86 : index
    %86 = memref.load %arg1[%c86] : memref<189xf32, #tpu.memory_space<smem>>
    %c87 = arith.constant 87 : index
    %87 = memref.load %arg1[%c87] : memref<189xf32, #tpu.memory_space<smem>>
    %c88 = arith.constant 88 : index
    %88 = memref.load %arg1[%c88] : memref<189xf32, #tpu.memory_space<smem>>
    %c89 = arith.constant 89 : index
    %89 = memref.load %arg1[%c89] : memref<189xf32, #tpu.memory_space<smem>>
    %c90 = arith.constant 90 : index
    %90 = memref.load %arg1[%c90] : memref<189xf32, #tpu.memory_space<smem>>
    %c91 = arith.constant 91 : index
    %91 = memref.load %arg1[%c91] : memref<189xf32, #tpu.memory_space<smem>>
    %c92 = arith.constant 92 : index
    %92 = memref.load %arg1[%c92] : memref<189xf32, #tpu.memory_space<smem>>
    %c93 = arith.constant 93 : index
    %93 = memref.load %arg1[%c93] : memref<189xf32, #tpu.memory_space<smem>>
    %c94 = arith.constant 94 : index
    %94 = memref.load %arg1[%c94] : memref<189xf32, #tpu.memory_space<smem>>
    %c95 = arith.constant 95 : index
    %95 = memref.load %arg1[%c95] : memref<189xf32, #tpu.memory_space<smem>>
    %c96 = arith.constant 96 : index
    %96 = memref.load %arg1[%c96] : memref<189xf32, #tpu.memory_space<smem>>
    %c97 = arith.constant 97 : index
    %97 = memref.load %arg1[%c97] : memref<189xf32, #tpu.memory_space<smem>>
    %c98 = arith.constant 98 : index
    %98 = memref.load %arg1[%c98] : memref<189xf32, #tpu.memory_space<smem>>
    %c99 = arith.constant 99 : index
    %99 = memref.load %arg1[%c99] : memref<189xf32, #tpu.memory_space<smem>>
    %c100 = arith.constant 100 : index
    %100 = memref.load %arg1[%c100] : memref<189xf32, #tpu.memory_space<smem>>
    %c101 = arith.constant 101 : index
    %101 = memref.load %arg1[%c101] : memref<189xf32, #tpu.memory_space<smem>>
    %c102 = arith.constant 102 : index
    %102 = memref.load %arg1[%c102] : memref<189xf32, #tpu.memory_space<smem>>
    %c103 = arith.constant 103 : index
    %103 = memref.load %arg1[%c103] : memref<189xf32, #tpu.memory_space<smem>>
    %c104 = arith.constant 104 : index
    %104 = memref.load %arg1[%c104] : memref<189xf32, #tpu.memory_space<smem>>
    %c105 = arith.constant 105 : index
    %105 = memref.load %arg1[%c105] : memref<189xf32, #tpu.memory_space<smem>>
    %c106 = arith.constant 106 : index
    %106 = memref.load %arg1[%c106] : memref<189xf32, #tpu.memory_space<smem>>
    %c107 = arith.constant 107 : index
    %107 = memref.load %arg1[%c107] : memref<189xf32, #tpu.memory_space<smem>>
    %c108 = arith.constant 108 : index
    %108 = memref.load %arg1[%c108] : memref<189xf32, #tpu.memory_space<smem>>
    %c109 = arith.constant 109 : index
    %109 = memref.load %arg1[%c109] : memref<189xf32, #tpu.memory_space<smem>>
    %c110 = arith.constant 110 : index
    %110 = memref.load %arg1[%c110] : memref<189xf32, #tpu.memory_space<smem>>
    %c111 = arith.constant 111 : index
    %111 = memref.load %arg1[%c111] : memref<189xf32, #tpu.memory_space<smem>>
    %c112 = arith.constant 112 : index
    %112 = memref.load %arg1[%c112] : memref<189xf32, #tpu.memory_space<smem>>
    %c113 = arith.constant 113 : index
    %113 = memref.load %arg1[%c113] : memref<189xf32, #tpu.memory_space<smem>>
    %c114 = arith.constant 114 : index
    %114 = memref.load %arg1[%c114] : memref<189xf32, #tpu.memory_space<smem>>
    %c115 = arith.constant 115 : index
    %115 = memref.load %arg1[%c115] : memref<189xf32, #tpu.memory_space<smem>>
    %c116 = arith.constant 116 : index
    %116 = memref.load %arg1[%c116] : memref<189xf32, #tpu.memory_space<smem>>
    %c117 = arith.constant 117 : index
    %117 = memref.load %arg1[%c117] : memref<189xf32, #tpu.memory_space<smem>>
    %c118 = arith.constant 118 : index
    %118 = memref.load %arg1[%c118] : memref<189xf32, #tpu.memory_space<smem>>
    %c119 = arith.constant 119 : index
    %119 = memref.load %arg1[%c119] : memref<189xf32, #tpu.memory_space<smem>>
    %c120 = arith.constant 120 : index
    %120 = memref.load %arg1[%c120] : memref<189xf32, #tpu.memory_space<smem>>
    %c121 = arith.constant 121 : index
    %121 = memref.load %arg1[%c121] : memref<189xf32, #tpu.memory_space<smem>>
    %c122 = arith.constant 122 : index
    %122 = memref.load %arg1[%c122] : memref<189xf32, #tpu.memory_space<smem>>
    %c123 = arith.constant 123 : index
    %123 = memref.load %arg1[%c123] : memref<189xf32, #tpu.memory_space<smem>>
    %c124 = arith.constant 124 : index
    %124 = memref.load %arg1[%c124] : memref<189xf32, #tpu.memory_space<smem>>
    %c125 = arith.constant 125 : index
    %125 = memref.load %arg1[%c125] : memref<189xf32, #tpu.memory_space<smem>>
    %c126 = arith.constant 126 : index
    %126 = memref.load %arg1[%c126] : memref<189xf32, #tpu.memory_space<smem>>
    %c127 = arith.constant 127 : index
    %127 = memref.load %arg1[%c127] : memref<189xf32, #tpu.memory_space<smem>>
    %c128 = arith.constant 128 : index
    %128 = memref.load %arg1[%c128] : memref<189xf32, #tpu.memory_space<smem>>
    %c129 = arith.constant 129 : index
    %129 = memref.load %arg1[%c129] : memref<189xf32, #tpu.memory_space<smem>>
    %c130 = arith.constant 130 : index
    %130 = memref.load %arg1[%c130] : memref<189xf32, #tpu.memory_space<smem>>
    %c131 = arith.constant 131 : index
    %131 = memref.load %arg1[%c131] : memref<189xf32, #tpu.memory_space<smem>>
    %c132 = arith.constant 132 : index
    %132 = memref.load %arg1[%c132] : memref<189xf32, #tpu.memory_space<smem>>
    %c133 = arith.constant 133 : index
    %133 = memref.load %arg1[%c133] : memref<189xf32, #tpu.memory_space<smem>>
    %c134 = arith.constant 134 : index
    %134 = memref.load %arg1[%c134] : memref<189xf32, #tpu.memory_space<smem>>
    %c135 = arith.constant 135 : index
    %135 = memref.load %arg1[%c135] : memref<189xf32, #tpu.memory_space<smem>>
    %c136 = arith.constant 136 : index
    %136 = memref.load %arg1[%c136] : memref<189xf32, #tpu.memory_space<smem>>
    %c137 = arith.constant 137 : index
    %137 = memref.load %arg1[%c137] : memref<189xf32, #tpu.memory_space<smem>>
    %c138 = arith.constant 138 : index
    %138 = memref.load %arg1[%c138] : memref<189xf32, #tpu.memory_space<smem>>
    %c139 = arith.constant 139 : index
    %139 = memref.load %arg1[%c139] : memref<189xf32, #tpu.memory_space<smem>>
    %c140 = arith.constant 140 : index
    %140 = memref.load %arg1[%c140] : memref<189xf32, #tpu.memory_space<smem>>
    %c141 = arith.constant 141 : index
    %141 = memref.load %arg1[%c141] : memref<189xf32, #tpu.memory_space<smem>>
    %c142 = arith.constant 142 : index
    %142 = memref.load %arg1[%c142] : memref<189xf32, #tpu.memory_space<smem>>
    %c143 = arith.constant 143 : index
    %143 = memref.load %arg1[%c143] : memref<189xf32, #tpu.memory_space<smem>>
    %c144 = arith.constant 144 : index
    %144 = memref.load %arg1[%c144] : memref<189xf32, #tpu.memory_space<smem>>
    %c145 = arith.constant 145 : index
    %145 = memref.load %arg1[%c145] : memref<189xf32, #tpu.memory_space<smem>>
    %c146 = arith.constant 146 : index
    %146 = memref.load %arg1[%c146] : memref<189xf32, #tpu.memory_space<smem>>
    %c147 = arith.constant 147 : index
    %147 = memref.load %arg1[%c147] : memref<189xf32, #tpu.memory_space<smem>>
    %c148 = arith.constant 148 : index
    %148 = memref.load %arg1[%c148] : memref<189xf32, #tpu.memory_space<smem>>
    %c149 = arith.constant 149 : index
    %149 = memref.load %arg1[%c149] : memref<189xf32, #tpu.memory_space<smem>>
    %c150 = arith.constant 150 : index
    %150 = memref.load %arg1[%c150] : memref<189xf32, #tpu.memory_space<smem>>
    %c151 = arith.constant 151 : index
    %151 = memref.load %arg1[%c151] : memref<189xf32, #tpu.memory_space<smem>>
    %c152 = arith.constant 152 : index
    %152 = memref.load %arg1[%c152] : memref<189xf32, #tpu.memory_space<smem>>
    %c153 = arith.constant 153 : index
    %153 = memref.load %arg1[%c153] : memref<189xf32, #tpu.memory_space<smem>>
    %c154 = arith.constant 154 : index
    %154 = memref.load %arg1[%c154] : memref<189xf32, #tpu.memory_space<smem>>
    %c155 = arith.constant 155 : index
    %155 = memref.load %arg1[%c155] : memref<189xf32, #tpu.memory_space<smem>>
    %c156 = arith.constant 156 : index
    %156 = memref.load %arg1[%c156] : memref<189xf32, #tpu.memory_space<smem>>
    %c157 = arith.constant 157 : index
    %157 = memref.load %arg1[%c157] : memref<189xf32, #tpu.memory_space<smem>>
    %c158 = arith.constant 158 : index
    %158 = memref.load %arg1[%c158] : memref<189xf32, #tpu.memory_space<smem>>
    %c159 = arith.constant 159 : index
    %159 = memref.load %arg1[%c159] : memref<189xf32, #tpu.memory_space<smem>>
    %c160 = arith.constant 160 : index
    %160 = memref.load %arg1[%c160] : memref<189xf32, #tpu.memory_space<smem>>
    %c161 = arith.constant 161 : index
    %161 = memref.load %arg1[%c161] : memref<189xf32, #tpu.memory_space<smem>>
    %c162 = arith.constant 162 : index
    %162 = memref.load %arg1[%c162] : memref<189xf32, #tpu.memory_space<smem>>
    %c163 = arith.constant 163 : index
    %163 = memref.load %arg1[%c163] : memref<189xf32, #tpu.memory_space<smem>>
    %c164 = arith.constant 164 : index
    %164 = memref.load %arg1[%c164] : memref<189xf32, #tpu.memory_space<smem>>
    %c165 = arith.constant 165 : index
    %165 = memref.load %arg1[%c165] : memref<189xf32, #tpu.memory_space<smem>>
    %c166 = arith.constant 166 : index
    %166 = memref.load %arg1[%c166] : memref<189xf32, #tpu.memory_space<smem>>
    %c167 = arith.constant 167 : index
    %167 = memref.load %arg1[%c167] : memref<189xf32, #tpu.memory_space<smem>>
    %c168 = arith.constant 168 : index
    %168 = memref.load %arg1[%c168] : memref<189xf32, #tpu.memory_space<smem>>
    %c169 = arith.constant 169 : index
    %169 = memref.load %arg1[%c169] : memref<189xf32, #tpu.memory_space<smem>>
    %c170 = arith.constant 170 : index
    %170 = memref.load %arg1[%c170] : memref<189xf32, #tpu.memory_space<smem>>
    %c171 = arith.constant 171 : index
    %171 = memref.load %arg1[%c171] : memref<189xf32, #tpu.memory_space<smem>>
    %c172 = arith.constant 172 : index
    %172 = memref.load %arg1[%c172] : memref<189xf32, #tpu.memory_space<smem>>
    %c173 = arith.constant 173 : index
    %173 = memref.load %arg1[%c173] : memref<189xf32, #tpu.memory_space<smem>>
    %c174 = arith.constant 174 : index
    %174 = memref.load %arg1[%c174] : memref<189xf32, #tpu.memory_space<smem>>
    %c175 = arith.constant 175 : index
    %175 = memref.load %arg1[%c175] : memref<189xf32, #tpu.memory_space<smem>>
    %c176 = arith.constant 176 : index
    %176 = memref.load %arg1[%c176] : memref<189xf32, #tpu.memory_space<smem>>
    %c177 = arith.constant 177 : index
    %177 = memref.load %arg1[%c177] : memref<189xf32, #tpu.memory_space<smem>>
    %c178 = arith.constant 178 : index
    %178 = memref.load %arg1[%c178] : memref<189xf32, #tpu.memory_space<smem>>
    %c179 = arith.constant 179 : index
    %179 = memref.load %arg1[%c179] : memref<189xf32, #tpu.memory_space<smem>>
    %c180 = arith.constant 180 : index
    %180 = memref.load %arg1[%c180] : memref<189xf32, #tpu.memory_space<smem>>
    %c181 = arith.constant 181 : index
    %181 = memref.load %arg1[%c181] : memref<189xf32, #tpu.memory_space<smem>>
    %c182 = arith.constant 182 : index
    %182 = memref.load %arg1[%c182] : memref<189xf32, #tpu.memory_space<smem>>
    %c183 = arith.constant 183 : index
    %183 = memref.load %arg1[%c183] : memref<189xf32, #tpu.memory_space<smem>>
    %c184 = arith.constant 184 : index
    %184 = memref.load %arg1[%c184] : memref<189xf32, #tpu.memory_space<smem>>
    %c185 = arith.constant 185 : index
    %185 = memref.load %arg1[%c185] : memref<189xf32, #tpu.memory_space<smem>>
    %c186 = arith.constant 186 : index
    %186 = memref.load %arg1[%c186] : memref<189xf32, #tpu.memory_space<smem>>
    %c187 = arith.constant 187 : index
    %187 = memref.load %arg1[%c187] : memref<189xf32, #tpu.memory_space<smem>>
    %c188 = arith.constant 188 : index
    %188 = memref.load %arg1[%c188] : memref<189xf32, #tpu.memory_space<smem>>
    %c0_0 = arith.constant 0 : index
    %c0_1 = arith.constant 0 : index
    %c0_2 = arith.constant 0 : index
    %189 = vector.load %arg2[%c0_0, %c0_1, %c0_2] : memref<9x1x128xf32, #tpu.memory_space<vmem>>, vector<1x1x128xf32>
    %190 = vector.shape_cast %189 : vector<1x1x128xf32> to vector<1x128xf32>
    %c1_3 = arith.constant 1 : index
    %c0_4 = arith.constant 0 : index
    %c0_5 = arith.constant 0 : index
    %191 = vector.load %arg2[%c1_3, %c0_4, %c0_5] : memref<9x1x128xf32, #tpu.memory_space<vmem>>, vector<1x1x128xf32>
    %192 = vector.shape_cast %191 : vector<1x1x128xf32> to vector<1x128xf32>
    %c2_6 = arith.constant 2 : index
    %c0_7 = arith.constant 0 : index
    %c0_8 = arith.constant 0 : index
    %193 = vector.load %arg2[%c2_6, %c0_7, %c0_8] : memref<9x1x128xf32, #tpu.memory_space<vmem>>, vector<1x1x128xf32>
    %194 = vector.shape_cast %193 : vector<1x1x128xf32> to vector<1x128xf32>
    %c3_9 = arith.constant 3 : index
    %c0_10 = arith.constant 0 : index
    %c0_11 = arith.constant 0 : index
    %195 = vector.load %arg2[%c3_9, %c0_10, %c0_11] : memref<9x1x128xf32, #tpu.memory_space<vmem>>, vector<1x1x128xf32>
    %196 = vector.shape_cast %195 : vector<1x1x128xf32> to vector<1x128xf32>
    %c4_12 = arith.constant 4 : index
    %c0_13 = arith.constant 0 : index
    %c0_14 = arith.constant 0 : index
    %197 = vector.load %arg2[%c4_12, %c0_13, %c0_14] : memref<9x1x128xf32, #tpu.memory_space<vmem>>, vector<1x1x128xf32>
    %198 = vector.shape_cast %197 : vector<1x1x128xf32> to vector<1x128xf32>
    %c5_15 = arith.constant 5 : index
    %c0_16 = arith.constant 0 : index
    %c0_17 = arith.constant 0 : index
    %199 = vector.load %arg2[%c5_15, %c0_16, %c0_17] : memref<9x1x128xf32, #tpu.memory_space<vmem>>, vector<1x1x128xf32>
    %200 = vector.shape_cast %199 : vector<1x1x128xf32> to vector<1x128xf32>
    %c6_18 = arith.constant 6 : index
    %c0_19 = arith.constant 0 : index
    %c0_20 = arith.constant 0 : index
    %201 = vector.load %arg2[%c6_18, %c0_19, %c0_20] : memref<9x1x128xf32, #tpu.memory_space<vmem>>, vector<1x1x128xf32>
    %202 = vector.shape_cast %201 : vector<1x1x128xf32> to vector<1x128xf32>
    %c7_21 = arith.constant 7 : index
    %c0_22 = arith.constant 0 : index
    %c0_23 = arith.constant 0 : index
    %203 = vector.load %arg2[%c7_21, %c0_22, %c0_23] : memref<9x1x128xf32, #tpu.memory_space<vmem>>, vector<1x1x128xf32>
    %204 = vector.shape_cast %203 : vector<1x1x128xf32> to vector<1x128xf32>
    %c8_24 = arith.constant 8 : index
    %c0_25 = arith.constant 0 : index
    %c0_26 = arith.constant 0 : index
    %205 = vector.load %arg2[%c8_24, %c0_25, %c0_26] : memref<9x1x128xf32, #tpu.memory_space<vmem>>, vector<1x1x128xf32>
    %206 = vector.shape_cast %205 : vector<1x1x128xf32> to vector<1x128xf32>
    %207 = vector.broadcast %0 : f32 to vector<1x128xf32>
    %208 = arith.mulf %207, %190 : vector<1x128xf32>
    %209 = vector.broadcast %6 : f32 to vector<1x128xf32>
    %210 = arith.mulf %209, %192 : vector<1x128xf32>
    %211 = arith.addf %208, %210 : vector<1x128xf32>
    %212 = vector.broadcast %12 : f32 to vector<1x128xf32>
    %213 = arith.mulf %212, %194 : vector<1x128xf32>
    %214 = arith.addf %211, %213 : vector<1x128xf32>
    %215 = vector.broadcast %18 : f32 to vector<1x128xf32>
    %216 = arith.mulf %215, %196 : vector<1x128xf32>
    %217 = arith.addf %214, %216 : vector<1x128xf32>
    %218 = vector.broadcast %24 : f32 to vector<1x128xf32>
    %219 = arith.mulf %218, %198 : vector<1x128xf32>
    %220 = arith.addf %217, %219 : vector<1x128xf32>
    %221 = vector.broadcast %30 : f32 to vector<1x128xf32>
    %222 = arith.mulf %221, %200 : vector<1x128xf32>
    %223 = arith.addf %220, %222 : vector<1x128xf32>
    %224 = vector.broadcast %36 : f32 to vector<1x128xf32>
    %225 = arith.mulf %224, %202 : vector<1x128xf32>
    %226 = arith.addf %223, %225 : vector<1x128xf32>
    %227 = vector.broadcast %42 : f32 to vector<1x128xf32>
    %228 = arith.mulf %227, %204 : vector<1x128xf32>
    %229 = arith.addf %226, %228 : vector<1x128xf32>
    %230 = vector.broadcast %48 : f32 to vector<1x128xf32>
    %231 = arith.mulf %230, %206 : vector<1x128xf32>
    %232 = arith.addf %229, %231 : vector<1x128xf32>
    %233 = vector.broadcast %54 : f32 to vector<1x128xf32>
    %234 = arith.addf %232, %233 : vector<1x128xf32>
    %235 = math.tanh %234 : vector<1x128xf32>
    %236 = vector.broadcast %1 : f32 to vector<1x128xf32>
    %237 = arith.mulf %236, %190 : vector<1x128xf32>
    %238 = vector.broadcast %7 : f32 to vector<1x128xf32>
    %239 = arith.mulf %238, %192 : vector<1x128xf32>
    %240 = arith.addf %237, %239 : vector<1x128xf32>
    %241 = vector.broadcast %13 : f32 to vector<1x128xf32>
    %242 = arith.mulf %241, %194 : vector<1x128xf32>
    %243 = arith.addf %240, %242 : vector<1x128xf32>
    %244 = vector.broadcast %19 : f32 to vector<1x128xf32>
    %245 = arith.mulf %244, %196 : vector<1x128xf32>
    %246 = arith.addf %243, %245 : vector<1x128xf32>
    %247 = vector.broadcast %25 : f32 to vector<1x128xf32>
    %248 = arith.mulf %247, %198 : vector<1x128xf32>
    %249 = arith.addf %246, %248 : vector<1x128xf32>
    %250 = vector.broadcast %31 : f32 to vector<1x128xf32>
    %251 = arith.mulf %250, %200 : vector<1x128xf32>
    %252 = arith.addf %249, %251 : vector<1x128xf32>
    %253 = vector.broadcast %37 : f32 to vector<1x128xf32>
    %254 = arith.mulf %253, %202 : vector<1x128xf32>
    %255 = arith.addf %252, %254 : vector<1x128xf32>
    %256 = vector.broadcast %43 : f32 to vector<1x128xf32>
    %257 = arith.mulf %256, %204 : vector<1x128xf32>
    %258 = arith.addf %255, %257 : vector<1x128xf32>
    %259 = vector.broadcast %49 : f32 to vector<1x128xf32>
    %260 = arith.mulf %259, %206 : vector<1x128xf32>
    %261 = arith.addf %258, %260 : vector<1x128xf32>
    %262 = vector.broadcast %55 : f32 to vector<1x128xf32>
    %263 = arith.addf %261, %262 : vector<1x128xf32>
    %264 = math.tanh %263 : vector<1x128xf32>
    %265 = vector.broadcast %2 : f32 to vector<1x128xf32>
    %266 = arith.mulf %265, %190 : vector<1x128xf32>
    %267 = vector.broadcast %8 : f32 to vector<1x128xf32>
    %268 = arith.mulf %267, %192 : vector<1x128xf32>
    %269 = arith.addf %266, %268 : vector<1x128xf32>
    %270 = vector.broadcast %14 : f32 to vector<1x128xf32>
    %271 = arith.mulf %270, %194 : vector<1x128xf32>
    %272 = arith.addf %269, %271 : vector<1x128xf32>
    %273 = vector.broadcast %20 : f32 to vector<1x128xf32>
    %274 = arith.mulf %273, %196 : vector<1x128xf32>
    %275 = arith.addf %272, %274 : vector<1x128xf32>
    %276 = vector.broadcast %26 : f32 to vector<1x128xf32>
    %277 = arith.mulf %276, %198 : vector<1x128xf32>
    %278 = arith.addf %275, %277 : vector<1x128xf32>
    %279 = vector.broadcast %32 : f32 to vector<1x128xf32>
    %280 = arith.mulf %279, %200 : vector<1x128xf32>
    %281 = arith.addf %278, %280 : vector<1x128xf32>
    %282 = vector.broadcast %38 : f32 to vector<1x128xf32>
    %283 = arith.mulf %282, %202 : vector<1x128xf32>
    %284 = arith.addf %281, %283 : vector<1x128xf32>
    %285 = vector.broadcast %44 : f32 to vector<1x128xf32>
    %286 = arith.mulf %285, %204 : vector<1x128xf32>
    %287 = arith.addf %284, %286 : vector<1x128xf32>
    %288 = vector.broadcast %50 : f32 to vector<1x128xf32>
    %289 = arith.mulf %288, %206 : vector<1x128xf32>
    %290 = arith.addf %287, %289 : vector<1x128xf32>
    %291 = vector.broadcast %56 : f32 to vector<1x128xf32>
    %292 = arith.addf %290, %291 : vector<1x128xf32>
    %293 = math.tanh %292 : vector<1x128xf32>
    %294 = vector.broadcast %3 : f32 to vector<1x128xf32>
    %295 = arith.mulf %294, %190 : vector<1x128xf32>
    %296 = vector.broadcast %9 : f32 to vector<1x128xf32>
    %297 = arith.mulf %296, %192 : vector<1x128xf32>
    %298 = arith.addf %295, %297 : vector<1x128xf32>
    %299 = vector.broadcast %15 : f32 to vector<1x128xf32>
    %300 = arith.mulf %299, %194 : vector<1x128xf32>
    %301 = arith.addf %298, %300 : vector<1x128xf32>
    %302 = vector.broadcast %21 : f32 to vector<1x128xf32>
    %303 = arith.mulf %302, %196 : vector<1x128xf32>
    %304 = arith.addf %301, %303 : vector<1x128xf32>
    %305 = vector.broadcast %27 : f32 to vector<1x128xf32>
    %306 = arith.mulf %305, %198 : vector<1x128xf32>
    %307 = arith.addf %304, %306 : vector<1x128xf32>
    %308 = vector.broadcast %33 : f32 to vector<1x128xf32>
    %309 = arith.mulf %308, %200 : vector<1x128xf32>
    %310 = arith.addf %307, %309 : vector<1x128xf32>
    %311 = vector.broadcast %39 : f32 to vector<1x128xf32>
    %312 = arith.mulf %311, %202 : vector<1x128xf32>
    %313 = arith.addf %310, %312 : vector<1x128xf32>
    %314 = vector.broadcast %45 : f32 to vector<1x128xf32>
    %315 = arith.mulf %314, %204 : vector<1x128xf32>
    %316 = arith.addf %313, %315 : vector<1x128xf32>
    %317 = vector.broadcast %51 : f32 to vector<1x128xf32>
    %318 = arith.mulf %317, %206 : vector<1x128xf32>
    %319 = arith.addf %316, %318 : vector<1x128xf32>
    %320 = vector.broadcast %57 : f32 to vector<1x128xf32>
    %321 = arith.addf %319, %320 : vector<1x128xf32>
    %322 = math.tanh %321 : vector<1x128xf32>
    %323 = vector.broadcast %4 : f32 to vector<1x128xf32>
    %324 = arith.mulf %323, %190 : vector<1x128xf32>
    %325 = vector.broadcast %10 : f32 to vector<1x128xf32>
    %326 = arith.mulf %325, %192 : vector<1x128xf32>
    %327 = arith.addf %324, %326 : vector<1x128xf32>
    %328 = vector.broadcast %16 : f32 to vector<1x128xf32>
    %329 = arith.mulf %328, %194 : vector<1x128xf32>
    %330 = arith.addf %327, %329 : vector<1x128xf32>
    %331 = vector.broadcast %22 : f32 to vector<1x128xf32>
    %332 = arith.mulf %331, %196 : vector<1x128xf32>
    %333 = arith.addf %330, %332 : vector<1x128xf32>
    %334 = vector.broadcast %28 : f32 to vector<1x128xf32>
    %335 = arith.mulf %334, %198 : vector<1x128xf32>
    %336 = arith.addf %333, %335 : vector<1x128xf32>
    %337 = vector.broadcast %34 : f32 to vector<1x128xf32>
    %338 = arith.mulf %337, %200 : vector<1x128xf32>
    %339 = arith.addf %336, %338 : vector<1x128xf32>
    %340 = vector.broadcast %40 : f32 to vector<1x128xf32>
    %341 = arith.mulf %340, %202 : vector<1x128xf32>
    %342 = arith.addf %339, %341 : vector<1x128xf32>
    %343 = vector.broadcast %46 : f32 to vector<1x128xf32>
    %344 = arith.mulf %343, %204 : vector<1x128xf32>
    %345 = arith.addf %342, %344 : vector<1x128xf32>
    %346 = vector.broadcast %52 : f32 to vector<1x128xf32>
    %347 = arith.mulf %346, %206 : vector<1x128xf32>
    %348 = arith.addf %345, %347 : vector<1x128xf32>
    %349 = vector.broadcast %58 : f32 to vector<1x128xf32>
    %350 = arith.addf %348, %349 : vector<1x128xf32>
    %351 = math.tanh %350 : vector<1x128xf32>
    %352 = vector.broadcast %5 : f32 to vector<1x128xf32>
    %353 = arith.mulf %352, %190 : vector<1x128xf32>
    %354 = vector.broadcast %11 : f32 to vector<1x128xf32>
    %355 = arith.mulf %354, %192 : vector<1x128xf32>
    %356 = arith.addf %353, %355 : vector<1x128xf32>
    %357 = vector.broadcast %17 : f32 to vector<1x128xf32>
    %358 = arith.mulf %357, %194 : vector<1x128xf32>
    %359 = arith.addf %356, %358 : vector<1x128xf32>
    %360 = vector.broadcast %23 : f32 to vector<1x128xf32>
    %361 = arith.mulf %360, %196 : vector<1x128xf32>
    %362 = arith.addf %359, %361 : vector<1x128xf32>
    %363 = vector.broadcast %29 : f32 to vector<1x128xf32>
    %364 = arith.mulf %363, %198 : vector<1x128xf32>
    %365 = arith.addf %362, %364 : vector<1x128xf32>
    %366 = vector.broadcast %35 : f32 to vector<1x128xf32>
    %367 = arith.mulf %366, %200 : vector<1x128xf32>
    %368 = arith.addf %365, %367 : vector<1x128xf32>
    %369 = vector.broadcast %41 : f32 to vector<1x128xf32>
    %370 = arith.mulf %369, %202 : vector<1x128xf32>
    %371 = arith.addf %368, %370 : vector<1x128xf32>
    %372 = vector.broadcast %47 : f32 to vector<1x128xf32>
    %373 = arith.mulf %372, %204 : vector<1x128xf32>
    %374 = arith.addf %371, %373 : vector<1x128xf32>
    %375 = vector.broadcast %53 : f32 to vector<1x128xf32>
    %376 = arith.mulf %375, %206 : vector<1x128xf32>
    %377 = arith.addf %374, %376 : vector<1x128xf32>
    %378 = vector.broadcast %59 : f32 to vector<1x128xf32>
    %379 = arith.addf %377, %378 : vector<1x128xf32>
    %380 = math.tanh %379 : vector<1x128xf32>
    %381 = vector.broadcast %60 : f32 to vector<1x128xf32>
    %382 = arith.mulf %381, %235 : vector<1x128xf32>
    %383 = vector.broadcast %81 : f32 to vector<1x128xf32>
    %384 = arith.mulf %383, %235 : vector<1x128xf32>
    %385 = vector.broadcast %63 : f32 to vector<1x128xf32>
    %386 = arith.mulf %385, %264 : vector<1x128xf32>
    %387 = arith.addf %382, %386 : vector<1x128xf32>
    %388 = vector.broadcast %84 : f32 to vector<1x128xf32>
    %389 = arith.mulf %388, %264 : vector<1x128xf32>
    %390 = arith.addf %384, %389 : vector<1x128xf32>
    %391 = vector.broadcast %66 : f32 to vector<1x128xf32>
    %392 = arith.mulf %391, %293 : vector<1x128xf32>
    %393 = arith.addf %387, %392 : vector<1x128xf32>
    %394 = vector.broadcast %87 : f32 to vector<1x128xf32>
    %395 = arith.mulf %394, %293 : vector<1x128xf32>
    %396 = arith.addf %390, %395 : vector<1x128xf32>
    %397 = vector.broadcast %69 : f32 to vector<1x128xf32>
    %398 = arith.mulf %397, %322 : vector<1x128xf32>
    %399 = arith.addf %393, %398 : vector<1x128xf32>
    %400 = vector.broadcast %90 : f32 to vector<1x128xf32>
    %401 = arith.mulf %400, %322 : vector<1x128xf32>
    %402 = arith.addf %396, %401 : vector<1x128xf32>
    %403 = vector.broadcast %72 : f32 to vector<1x128xf32>
    %404 = arith.mulf %403, %351 : vector<1x128xf32>
    %405 = arith.addf %399, %404 : vector<1x128xf32>
    %406 = vector.broadcast %93 : f32 to vector<1x128xf32>
    %407 = arith.mulf %406, %351 : vector<1x128xf32>
    %408 = arith.addf %402, %407 : vector<1x128xf32>
    %409 = vector.broadcast %75 : f32 to vector<1x128xf32>
    %410 = arith.mulf %409, %380 : vector<1x128xf32>
    %411 = arith.addf %405, %410 : vector<1x128xf32>
    %412 = vector.broadcast %96 : f32 to vector<1x128xf32>
    %413 = arith.mulf %412, %380 : vector<1x128xf32>
    %414 = arith.addf %408, %413 : vector<1x128xf32>
    %415 = vector.broadcast %78 : f32 to vector<1x128xf32>
    %416 = arith.addf %411, %415 : vector<1x128xf32>
    %417 = vector.broadcast %99 : f32 to vector<1x128xf32>
    %418 = arith.addf %414, %417 : vector<1x128xf32>
    %419 = math.exp %418 : vector<1x128xf32>
    %c0_27 = arith.constant 0 : index
    %c0_28 = arith.constant 0 : index
    %c0_29 = arith.constant 0 : index
    %420 = vector.load %arg4[%c0_27, %c0_28, %c0_29] : memref<15x1x128xf32, #tpu.memory_space<vmem>>, vector<1x1x128xf32>
    %421 = vector.shape_cast %420 : vector<1x1x128xf32> to vector<1x128xf32>
    %422 = vector.shape_cast %416 : vector<1x128xf32> to vector<1x1x128xf32>
    tpu.vector_store %arg4[%c0_27, %c0_28, %c0_29], %422 {strides = array<i32>} : memref<15x1x128xf32, #tpu.memory_space<vmem>>, vector<1x1x128xf32>,
    %c3_30 = arith.constant 3 : index
    %c0_31 = arith.constant 0 : index
    %c0_32 = arith.constant 0 : index
    %423 = vector.load %arg4[%c3_30, %c0_31, %c0_32] : memref<15x1x128xf32, #tpu.memory_space<vmem>>, vector<1x1x128xf32>
    %424 = vector.shape_cast %423 : vector<1x1x128xf32> to vector<1x128xf32>
    %425 = vector.shape_cast %419 : vector<1x128xf32> to vector<1x1x128xf32>
    tpu.vector_store %arg4[%c3_30, %c0_31, %c0_32], %425 {strides = array<i32>} : memref<15x1x128xf32, #tpu.memory_space<vmem>>, vector<1x1x128xf32>,
    %c0_33 = arith.constant 0 : index
    %c0_34 = arith.constant 0 : index
    %c0_35 = arith.constant 0 : index
    %426 = vector.load %arg3[%c0_33, %c0_34, %c0_35] : memref<3x1x128xf32, #tpu.memory_space<vmem>>, vector<1x1x128xf32>
    %427 = vector.shape_cast %426 : vector<1x1x128xf32> to vector<1x128xf32>
    %428 = arith.mulf %419, %427 : vector<1x128xf32>
    %429 = arith.addf %416, %428 : vector<1x128xf32>
    %430 = vector.broadcast %61 : f32 to vector<1x128xf32>
    %431 = arith.mulf %430, %235 : vector<1x128xf32>
    %432 = vector.broadcast %82 : f32 to vector<1x128xf32>
    %433 = arith.mulf %432, %235 : vector<1x128xf32>
    %434 = vector.broadcast %64 : f32 to vector<1x128xf32>
    %435 = arith.mulf %434, %264 : vector<1x128xf32>
    %436 = arith.addf %431, %435 : vector<1x128xf32>
    %437 = vector.broadcast %85 : f32 to vector<1x128xf32>
    %438 = arith.mulf %437, %264 : vector<1x128xf32>
    %439 = arith.addf %433, %438 : vector<1x128xf32>
    %440 = vector.broadcast %67 : f32 to vector<1x128xf32>
    %441 = arith.mulf %440, %293 : vector<1x128xf32>
    %442 = arith.addf %436, %441 : vector<1x128xf32>
    %443 = vector.broadcast %88 : f32 to vector<1x128xf32>
    %444 = arith.mulf %443, %293 : vector<1x128xf32>
    %445 = arith.addf %439, %444 : vector<1x128xf32>
    %446 = vector.broadcast %70 : f32 to vector<1x128xf32>
    %447 = arith.mulf %446, %322 : vector<1x128xf32>
    %448 = arith.addf %442, %447 : vector<1x128xf32>
    %449 = vector.broadcast %91 : f32 to vector<1x128xf32>
    %450 = arith.mulf %449, %322 : vector<1x128xf32>
    %451 = arith.addf %445, %450 : vector<1x128xf32>
    %452 = vector.broadcast %73 : f32 to vector<1x128xf32>
    %453 = arith.mulf %452, %351 : vector<1x128xf32>
    %454 = arith.addf %448, %453 : vector<1x128xf32>
    %455 = vector.broadcast %94 : f32 to vector<1x128xf32>
    %456 = arith.mulf %455, %351 : vector<1x128xf32>
    %457 = arith.addf %451, %456 : vector<1x128xf32>
    %458 = vector.broadcast %76 : f32 to vector<1x128xf32>
    %459 = arith.mulf %458, %380 : vector<1x128xf32>
    %460 = arith.addf %454, %459 : vector<1x128xf32>
    %461 = vector.broadcast %97 : f32 to vector<1x128xf32>
    %462 = arith.mulf %461, %380 : vector<1x128xf32>
    %463 = arith.addf %457, %462 : vector<1x128xf32>
    %464 = vector.broadcast %79 : f32 to vector<1x128xf32>
    %465 = arith.addf %460, %464 : vector<1x128xf32>
    %466 = vector.broadcast %100 : f32 to vector<1x128xf32>
    %467 = arith.addf %463, %466 : vector<1x128xf32>
    %468 = math.exp %467 : vector<1x128xf32>
    %c1_36 = arith.constant 1 : index
    %c0_37 = arith.constant 0 : index
    %c0_38 = arith.constant 0 : index
    %469 = vector.load %arg4[%c1_36, %c0_37, %c0_38] : memref<15x1x128xf32, #tpu.memory_space<vmem>>, vector<1x1x128xf32>
    %470 = vector.shape_cast %469 : vector<1x1x128xf32> to vector<1x128xf32>
    %471 = vector.shape_cast %465 : vector<1x128xf32> to vector<1x1x128xf32>
    tpu.vector_store %arg4[%c1_36, %c0_37, %c0_38], %471 {strides = array<i32>} : memref<15x1x128xf32, #tpu.memory_space<vmem>>, vector<1x1x128xf32>,
    %c4_39 = arith.constant 4 : index
    %c0_40 = arith.constant 0 : index
    %c0_41 = arith.constant 0 : index
    %472 = vector.load %arg4[%c4_39, %c0_40, %c0_41] : memref<15x1x128xf32, #tpu.memory_space<vmem>>, vector<1x1x128xf32>
    %473 = vector.shape_cast %472 : vector<1x1x128xf32> to vector<1x128xf32>
    %474 = vector.shape_cast %468 : vector<1x128xf32> to vector<1x1x128xf32>
    tpu.vector_store %arg4[%c4_39, %c0_40, %c0_41], %474 {strides = array<i32>} : memref<15x1x128xf32, #tpu.memory_space<vmem>>, vector<1x1x128xf32>,
    %c1_42 = arith.constant 1 : index
    %c0_43 = arith.constant 0 : index
    %c0_44 = arith.constant 0 : index
    %475 = vector.load %arg3[%c1_42, %c0_43, %c0_44] : memref<3x1x128xf32, #tpu.memory_space<vmem>>, vector<1x1x128xf32>
    %476 = vector.shape_cast %475 : vector<1x1x128xf32> to vector<1x128xf32>
    %477 = arith.mulf %468, %476 : vector<1x128xf32>
    %478 = arith.addf %465, %477 : vector<1x128xf32>
    %479 = vector.broadcast %62 : f32 to vector<1x128xf32>
    %480 = arith.mulf %479, %235 : vector<1x128xf32>
    %481 = vector.broadcast %83 : f32 to vector<1x128xf32>
    %482 = arith.mulf %481, %235 : vector<1x128xf32>
    %483 = vector.broadcast %65 : f32 to vector<1x128xf32>
    %484 = arith.mulf %483, %264 : vector<1x128xf32>
    %485 = arith.addf %480, %484 : vector<1x128xf32>
    %486 = vector.broadcast %86 : f32 to vector<1x128xf32>
    %487 = arith.mulf %486, %264 : vector<1x128xf32>
    %488 = arith.addf %482, %487 : vector<1x128xf32>
    %489 = vector.broadcast %68 : f32 to vector<1x128xf32>
    %490 = arith.mulf %489, %293 : vector<1x128xf32>
    %491 = arith.addf %485, %490 : vector<1x128xf32>
    %492 = vector.broadcast %89 : f32 to vector<1x128xf32>
    %493 = arith.mulf %492, %293 : vector<1x128xf32>
    %494 = arith.addf %488, %493 : vector<1x128xf32>
    %495 = vector.broadcast %71 : f32 to vector<1x128xf32>
    %496 = arith.mulf %495, %322 : vector<1x128xf32>
    %497 = arith.addf %491, %496 : vector<1x128xf32>
    %498 = vector.broadcast %92 : f32 to vector<1x128xf32>
    %499 = arith.mulf %498, %322 : vector<1x128xf32>
    %500 = arith.addf %494, %499 : vector<1x128xf32>
    %501 = vector.broadcast %74 : f32 to vector<1x128xf32>
    %502 = arith.mulf %501, %351 : vector<1x128xf32>
    %503 = arith.addf %497, %502 : vector<1x128xf32>
    %504 = vector.broadcast %95 : f32 to vector<1x128xf32>
    %505 = arith.mulf %504, %351 : vector<1x128xf32>
    %506 = arith.addf %500, %505 : vector<1x128xf32>
    %507 = vector.broadcast %77 : f32 to vector<1x128xf32>
    %508 = arith.mulf %507, %380 : vector<1x128xf32>
    %509 = arith.addf %503, %508 : vector<1x128xf32>
    %510 = vector.broadcast %98 : f32 to vector<1x128xf32>
    %511 = arith.mulf %510, %380 : vector<1x128xf32>
    %512 = arith.addf %506, %511 : vector<1x128xf32>
    %513 = vector.broadcast %80 : f32 to vector<1x128xf32>
    %514 = arith.addf %509, %513 : vector<1x128xf32>
    %515 = vector.broadcast %101 : f32 to vector<1x128xf32>
    %516 = arith.addf %512, %515 : vector<1x128xf32>
    %517 = math.exp %516 : vector<1x128xf32>
    %c2_45 = arith.constant 2 : index
    %c0_46 = arith.constant 0 : index
    %c0_47 = arith.constant 0 : index
    %518 = vector.load %arg4[%c2_45, %c0_46, %c0_47] : memref<15x1x128xf32, #tpu.memory_space<vmem>>, vector<1x1x128xf32>
    %519 = vector.shape_cast %518 : vector<1x1x128xf32> to vector<1x128xf32>
    %520 = vector.shape_cast %514 : vector<1x128xf32> to vector<1x1x128xf32>
    tpu.vector_store %arg4[%c2_45, %c0_46, %c0_47], %520 {strides = array<i32>} : memref<15x1x128xf32, #tpu.memory_space<vmem>>, vector<1x1x128xf32>,
    %c5_48 = arith.constant 5 : index
    %c0_49 = arith.constant 0 : index
    %c0_50 = arith.constant 0 : index
    %521 = vector.load %arg4[%c5_48, %c0_49, %c0_50] : memref<15x1x128xf32, #tpu.memory_space<vmem>>, vector<1x1x128xf32>
    %522 = vector.shape_cast %521 : vector<1x1x128xf32> to vector<1x128xf32>
    %523 = vector.shape_cast %517 : vector<1x128xf32> to vector<1x1x128xf32>
    tpu.vector_store %arg4[%c5_48, %c0_49, %c0_50], %523 {strides = array<i32>} : memref<15x1x128xf32, #tpu.memory_space<vmem>>, vector<1x1x128xf32>,
    %c2_51 = arith.constant 2 : index
    %c0_52 = arith.constant 0 : index
    %c0_53 = arith.constant 0 : index
    %524 = vector.load %arg3[%c2_51, %c0_52, %c0_53] : memref<3x1x128xf32, #tpu.memory_space<vmem>>, vector<1x1x128xf32>
    %525 = vector.shape_cast %524 : vector<1x1x128xf32> to vector<1x128xf32>
    %526 = arith.mulf %517, %525 : vector<1x128xf32>
    %527 = arith.addf %514, %526 : vector<1x128xf32>
    %528 = vector.broadcast %102 : f32 to vector<1x128xf32>
    %529 = arith.mulf %528, %429 : vector<1x128xf32>
    %530 = vector.broadcast %108 : f32 to vector<1x128xf32>
    %531 = arith.mulf %530, %478 : vector<1x128xf32>
    %532 = arith.addf %529, %531 : vector<1x128xf32>
    %533 = vector.broadcast %114 : f32 to vector<1x128xf32>
    %534 = arith.mulf %533, %527 : vector<1x128xf32>
    %535 = arith.addf %532, %534 : vector<1x128xf32>
    %536 = vector.broadcast %120 : f32 to vector<1x128xf32>
    %537 = arith.addf %535, %536 : vector<1x128xf32>
    %538 = math.tanh %537 : vector<1x128xf32>
    %539 = vector.broadcast %103 : f32 to vector<1x128xf32>
    %540 = arith.mulf %539, %429 : vector<1x128xf32>
    %541 = vector.broadcast %109 : f32 to vector<1x128xf32>
    %542 = arith.mulf %541, %478 : vector<1x128xf32>
    %543 = arith.addf %540, %542 : vector<1x128xf32>
    %544 = vector.broadcast %115 : f32 to vector<1x128xf32>
    %545 = arith.mulf %544, %527 : vector<1x128xf32>
    %546 = arith.addf %543, %545 : vector<1x128xf32>
    %547 = vector.broadcast %121 : f32 to vector<1x128xf32>
    %548 = arith.addf %546, %547 : vector<1x128xf32>
    %549 = math.tanh %548 : vector<1x128xf32>
    %550 = vector.broadcast %104 : f32 to vector<1x128xf32>
    %551 = arith.mulf %550, %429 : vector<1x128xf32>
    %552 = vector.broadcast %110 : f32 to vector<1x128xf32>
    %553 = arith.mulf %552, %478 : vector<1x128xf32>
    %554 = arith.addf %551, %553 : vector<1x128xf32>
    %555 = vector.broadcast %116 : f32 to vector<1x128xf32>
    %556 = arith.mulf %555, %527 : vector<1x128xf32>
    %557 = arith.addf %554, %556 : vector<1x128xf32>
    %558 = vector.broadcast %122 : f32 to vector<1x128xf32>
    %559 = arith.addf %557, %558 : vector<1x128xf32>
    %560 = math.tanh %559 : vector<1x128xf32>
    %561 = vector.broadcast %105 : f32 to vector<1x128xf32>
    %562 = arith.mulf %561, %429 : vector<1x128xf32>
    %563 = vector.broadcast %111 : f32 to vector<1x128xf32>
    %564 = arith.mulf %563, %478 : vector<1x128xf32>
    %565 = arith.addf %562, %564 : vector<1x128xf32>
    %566 = vector.broadcast %117 : f32 to vector<1x128xf32>
    %567 = arith.mulf %566, %527 : vector<1x128xf32>
    %568 = arith.addf %565, %567 : vector<1x128xf32>
    %569 = vector.broadcast %123 : f32 to vector<1x128xf32>
    %570 = arith.addf %568, %569 : vector<1x128xf32>
    %571 = math.tanh %570 : vector<1x128xf32>
    %572 = vector.broadcast %106 : f32 to vector<1x128xf32>
    %573 = arith.mulf %572, %429 : vector<1x128xf32>
    %574 = vector.broadcast %112 : f32 to vector<1x128xf32>
    %575 = arith.mulf %574, %478 : vector<1x128xf32>
    %576 = arith.addf %573, %575 : vector<1x128xf32>
    %577 = vector.broadcast %118 : f32 to vector<1x128xf32>
    %578 = arith.mulf %577, %527 : vector<1x128xf32>
    %579 = arith.addf %576, %578 : vector<1x128xf32>
    %580 = vector.broadcast %124 : f32 to vector<1x128xf32>
    %581 = arith.addf %579, %580 : vector<1x128xf32>
    %582 = math.tanh %581 : vector<1x128xf32>
    %583 = vector.broadcast %107 : f32 to vector<1x128xf32>
    %584 = arith.mulf %583, %429 : vector<1x128xf32>
    %585 = vector.broadcast %113 : f32 to vector<1x128xf32>
    %586 = arith.mulf %585, %478 : vector<1x128xf32>
    %587 = arith.addf %584, %586 : vector<1x128xf32>
    %588 = vector.broadcast %119 : f32 to vector<1x128xf32>
    %589 = arith.mulf %588, %527 : vector<1x128xf32>
    %590 = arith.addf %587, %589 : vector<1x128xf32>
    %591 = vector.broadcast %125 : f32 to vector<1x128xf32>
    %592 = arith.addf %590, %591 : vector<1x128xf32>
    %593 = math.tanh %592 : vector<1x128xf32>
    %594 = vector.broadcast %126 : f32 to vector<1x128xf32>
    %595 = arith.mulf %594, %538 : vector<1x128xf32>
    %596 = vector.broadcast %135 : f32 to vector<1x128xf32>
    %597 = arith.mulf %596, %549 : vector<1x128xf32>
    %598 = arith.addf %595, %597 : vector<1x128xf32>
    %599 = vector.broadcast %144 : f32 to vector<1x128xf32>
    %600 = arith.mulf %599, %560 : vector<1x128xf32>
    %601 = arith.addf %598, %600 : vector<1x128xf32>
    %602 = vector.broadcast %153 : f32 to vector<1x128xf32>
    %603 = arith.mulf %602, %571 : vector<1x128xf32>
    %604 = arith.addf %601, %603 : vector<1x128xf32>
    %605 = vector.broadcast %162 : f32 to vector<1x128xf32>
    %606 = arith.mulf %605, %582 : vector<1x128xf32>
    %607 = arith.addf %604, %606 : vector<1x128xf32>
    %608 = vector.broadcast %171 : f32 to vector<1x128xf32>
    %609 = arith.mulf %608, %593 : vector<1x128xf32>
    %610 = arith.addf %607, %609 : vector<1x128xf32>
    %611 = vector.broadcast %180 : f32 to vector<1x128xf32>
    %612 = arith.addf %610, %611 : vector<1x128xf32>
    %c6_54 = arith.constant 6 : index
    %c0_55 = arith.constant 0 : index
    %c0_56 = arith.constant 0 : index
    %613 = vector.load %arg4[%c6_54, %c0_55, %c0_56] : memref<15x1x128xf32, #tpu.memory_space<vmem>>, vector<1x1x128xf32>
    %614 = vector.shape_cast %613 : vector<1x1x128xf32> to vector<1x128xf32>
    %615 = vector.shape_cast %612 : vector<1x128xf32> to vector<1x1x128xf32>
    tpu.vector_store %arg4[%c6_54, %c0_55, %c0_56], %615 {strides = array<i32>} : memref<15x1x128xf32, #tpu.memory_space<vmem>>, vector<1x1x128xf32>,
    %616 = vector.broadcast %127 : f32 to vector<1x128xf32>
    %617 = arith.mulf %616, %538 : vector<1x128xf32>
    %618 = vector.broadcast %136 : f32 to vector<1x128xf32>
    %619 = arith.mulf %618, %549 : vector<1x128xf32>
    %620 = arith.addf %617, %619 : vector<1x128xf32>
    %621 = vector.broadcast %145 : f32 to vector<1x128xf32>
    %622 = arith.mulf %621, %560 : vector<1x128xf32>
    %623 = arith.addf %620, %622 : vector<1x128xf32>
    %624 = vector.broadcast %154 : f32 to vector<1x128xf32>
    %625 = arith.mulf %624, %571 : vector<1x128xf32>
    %626 = arith.addf %623, %625 : vector<1x128xf32>
    %627 = vector.broadcast %163 : f32 to vector<1x128xf32>
    %628 = arith.mulf %627, %582 : vector<1x128xf32>
    %629 = arith.addf %626, %628 : vector<1x128xf32>
    %630 = vector.broadcast %172 : f32 to vector<1x128xf32>
    %631 = arith.mulf %630, %593 : vector<1x128xf32>
    %632 = arith.addf %629, %631 : vector<1x128xf32>
    %633 = vector.broadcast %181 : f32 to vector<1x128xf32>
    %634 = arith.addf %632, %633 : vector<1x128xf32>
    %c7_57 = arith.constant 7 : index
    %c0_58 = arith.constant 0 : index
    %c0_59 = arith.constant 0 : index
    %635 = vector.load %arg4[%c7_57, %c0_58, %c0_59] : memref<15x1x128xf32, #tpu.memory_space<vmem>>, vector<1x1x128xf32>
    %636 = vector.shape_cast %635 : vector<1x1x128xf32> to vector<1x128xf32>
    %637 = vector.shape_cast %634 : vector<1x128xf32> to vector<1x1x128xf32>
    tpu.vector_store %arg4[%c7_57, %c0_58, %c0_59], %637 {strides = array<i32>} : memref<15x1x128xf32, #tpu.memory_space<vmem>>, vector<1x1x128xf32>,
    %638 = vector.broadcast %128 : f32 to vector<1x128xf32>
    %639 = arith.mulf %638, %538 : vector<1x128xf32>
    %640 = vector.broadcast %137 : f32 to vector<1x128xf32>
    %641 = arith.mulf %640, %549 : vector<1x128xf32>
    %642 = arith.addf %639, %641 : vector<1x128xf32>
    %643 = vector.broadcast %146 : f32 to vector<1x128xf32>
    %644 = arith.mulf %643, %560 : vector<1x128xf32>
    %645 = arith.addf %642, %644 : vector<1x128xf32>
    %646 = vector.broadcast %155 : f32 to vector<1x128xf32>
    %647 = arith.mulf %646, %571 : vector<1x128xf32>
    %648 = arith.addf %645, %647 : vector<1x128xf32>
    %649 = vector.broadcast %164 : f32 to vector<1x128xf32>
    %650 = arith.mulf %649, %582 : vector<1x128xf32>
    %651 = arith.addf %648, %650 : vector<1x128xf32>
    %652 = vector.broadcast %173 : f32 to vector<1x128xf32>
    %653 = arith.mulf %652, %593 : vector<1x128xf32>
    %654 = arith.addf %651, %653 : vector<1x128xf32>
    %655 = vector.broadcast %182 : f32 to vector<1x128xf32>
    %656 = arith.addf %654, %655 : vector<1x128xf32>
    %c8_60 = arith.constant 8 : index
    %c0_61 = arith.constant 0 : index
    %c0_62 = arith.constant 0 : index
    %657 = vector.load %arg4[%c8_60, %c0_61, %c0_62] : memref<15x1x128xf32, #tpu.memory_space<vmem>>, vector<1x1x128xf32>
    %658 = vector.shape_cast %657 : vector<1x1x128xf32> to vector<1x128xf32>
    %659 = vector.shape_cast %656 : vector<1x128xf32> to vector<1x1x128xf32>
    tpu.vector_store %arg4[%c8_60, %c0_61, %c0_62], %659 {strides = array<i32>} : memref<15x1x128xf32, #tpu.memory_space<vmem>>, vector<1x1x128xf32>,
    %660 = vector.broadcast %129 : f32 to vector<1x128xf32>
    %661 = arith.mulf %660, %538 : vector<1x128xf32>
    %662 = vector.broadcast %138 : f32 to vector<1x128xf32>
    %663 = arith.mulf %662, %549 : vector<1x128xf32>
    %664 = arith.addf %661, %663 : vector<1x128xf32>
    %665 = vector.broadcast %147 : f32 to vector<1x128xf32>
    %666 = arith.mulf %665, %560 : vector<1x128xf32>
    %667 = arith.addf %664, %666 : vector<1x128xf32>
    %668 = vector.broadcast %156 : f32 to vector<1x128xf32>
    %669 = arith.mulf %668, %571 : vector<1x128xf32>
    %670 = arith.addf %667, %669 : vector<1x128xf32>
    %671 = vector.broadcast %165 : f32 to vector<1x128xf32>
    %672 = arith.mulf %671, %582 : vector<1x128xf32>
    %673 = arith.addf %670, %672 : vector<1x128xf32>
    %674 = vector.broadcast %174 : f32 to vector<1x128xf32>
    %675 = arith.mulf %674, %593 : vector<1x128xf32>
    %676 = arith.addf %673, %675 : vector<1x128xf32>
    %677 = vector.broadcast %183 : f32 to vector<1x128xf32>
    %678 = arith.addf %676, %677 : vector<1x128xf32>
    %c9_63 = arith.constant 9 : index
    %c0_64 = arith.constant 0 : index
    %c0_65 = arith.constant 0 : index
    %679 = vector.load %arg4[%c9_63, %c0_64, %c0_65] : memref<15x1x128xf32, #tpu.memory_space<vmem>>, vector<1x1x128xf32>
    %680 = vector.shape_cast %679 : vector<1x1x128xf32> to vector<1x128xf32>
    %681 = vector.shape_cast %678 : vector<1x128xf32> to vector<1x1x128xf32>
    tpu.vector_store %arg4[%c9_63, %c0_64, %c0_65], %681 {strides = array<i32>} : memref<15x1x128xf32, #tpu.memory_space<vmem>>, vector<1x1x128xf32>,
    %682 = vector.broadcast %130 : f32 to vector<1x128xf32>
    %683 = arith.mulf %682, %538 : vector<1x128xf32>
    %684 = vector.broadcast %139 : f32 to vector<1x128xf32>
    %685 = arith.mulf %684, %549 : vector<1x128xf32>
    %686 = arith.addf %683, %685 : vector<1x128xf32>
    %687 = vector.broadcast %148 : f32 to vector<1x128xf32>
    %688 = arith.mulf %687, %560 : vector<1x128xf32>
    %689 = arith.addf %686, %688 : vector<1x128xf32>
    %690 = vector.broadcast %157 : f32 to vector<1x128xf32>
    %691 = arith.mulf %690, %571 : vector<1x128xf32>
    %692 = arith.addf %689, %691 : vector<1x128xf32>
    %693 = vector.broadcast %166 : f32 to vector<1x128xf32>
    %694 = arith.mulf %693, %582 : vector<1x128xf32>
    %695 = arith.addf %692, %694 : vector<1x128xf32>
    %696 = vector.broadcast %175 : f32 to vector<1x128xf32>
    %697 = arith.mulf %696, %593 : vector<1x128xf32>
    %698 = arith.addf %695, %697 : vector<1x128xf32>
    %699 = vector.broadcast %184 : f32 to vector<1x128xf32>
    %700 = arith.addf %698, %699 : vector<1x128xf32>
    %c10_66 = arith.constant 10 : index
    %c0_67 = arith.constant 0 : index
    %c0_68 = arith.constant 0 : index
    %701 = vector.load %arg4[%c10_66, %c0_67, %c0_68] : memref<15x1x128xf32, #tpu.memory_space<vmem>>, vector<1x1x128xf32>
    %702 = vector.shape_cast %701 : vector<1x1x128xf32> to vector<1x128xf32>
    %703 = vector.shape_cast %700 : vector<1x128xf32> to vector<1x1x128xf32>
    tpu.vector_store %arg4[%c10_66, %c0_67, %c0_68], %703 {strides = array<i32>} : memref<15x1x128xf32, #tpu.memory_space<vmem>>, vector<1x1x128xf32>,
    %704 = vector.broadcast %131 : f32 to vector<1x128xf32>
    %705 = arith.mulf %704, %538 : vector<1x128xf32>
    %706 = vector.broadcast %140 : f32 to vector<1x128xf32>
    %707 = arith.mulf %706, %549 : vector<1x128xf32>
    %708 = arith.addf %705, %707 : vector<1x128xf32>
    %709 = vector.broadcast %149 : f32 to vector<1x128xf32>
    %710 = arith.mulf %709, %560 : vector<1x128xf32>
    %711 = arith.addf %708, %710 : vector<1x128xf32>
    %712 = vector.broadcast %158 : f32 to vector<1x128xf32>
    %713 = arith.mulf %712, %571 : vector<1x128xf32>
    %714 = arith.addf %711, %713 : vector<1x128xf32>
    %715 = vector.broadcast %167 : f32 to vector<1x128xf32>
    %716 = arith.mulf %715, %582 : vector<1x128xf32>
    %717 = arith.addf %714, %716 : vector<1x128xf32>
    %718 = vector.broadcast %176 : f32 to vector<1x128xf32>
    %719 = arith.mulf %718, %593 : vector<1x128xf32>
    %720 = arith.addf %717, %719 : vector<1x128xf32>
    %721 = vector.broadcast %185 : f32 to vector<1x128xf32>
    %722 = arith.addf %720, %721 : vector<1x128xf32>
    %c11_69 = arith.constant 11 : index
    %c0_70 = arith.constant 0 : index
    %c0_71 = arith.constant 0 : index
    %723 = vector.load %arg4[%c11_69, %c0_70, %c0_71] : memref<15x1x128xf32, #tpu.memory_space<vmem>>, vector<1x1x128xf32>
    %724 = vector.shape_cast %723 : vector<1x1x128xf32> to vector<1x128xf32>
    %725 = vector.shape_cast %722 : vector<1x128xf32> to vector<1x1x128xf32>
    tpu.vector_store %arg4[%c11_69, %c0_70, %c0_71], %725 {strides = array<i32>} : memref<15x1x128xf32, #tpu.memory_space<vmem>>, vector<1x1x128xf32>,
    %726 = vector.broadcast %132 : f32 to vector<1x128xf32>
    %727 = arith.mulf %726, %538 : vector<1x128xf32>
    %728 = vector.broadcast %141 : f32 to vector<1x128xf32>
    %729 = arith.mulf %728, %549 : vector<1x128xf32>
    %730 = arith.addf %727, %729 : vector<1x128xf32>
    %731 = vector.broadcast %150 : f32 to vector<1x128xf32>
    %732 = arith.mulf %731, %560 : vector<1x128xf32>
    %733 = arith.addf %730, %732 : vector<1x128xf32>
    %734 = vector.broadcast %159 : f32 to vector<1x128xf32>
    %735 = arith.mulf %734, %571 : vector<1x128xf32>
    %736 = arith.addf %733, %735 : vector<1x128xf32>
    %737 = vector.broadcast %168 : f32 to vector<1x128xf32>
    %738 = arith.mulf %737, %582 : vector<1x128xf32>
    %739 = arith.addf %736, %738 : vector<1x128xf32>
    %740 = vector.broadcast %177 : f32 to vector<1x128xf32>
    %741 = arith.mulf %740, %593 : vector<1x128xf32>
    %742 = arith.addf %739, %741 : vector<1x128xf32>
    %743 = vector.broadcast %186 : f32 to vector<1x128xf32>
    %744 = arith.addf %742, %743 : vector<1x128xf32>
    %c12_72 = arith.constant 12 : index
    %c0_73 = arith.constant 0 : index
    %c0_74 = arith.constant 0 : index
    %745 = vector.load %arg4[%c12_72, %c0_73, %c0_74] : memref<15x1x128xf32, #tpu.memory_space<vmem>>, vector<1x1x128xf32>
    %746 = vector.shape_cast %745 : vector<1x1x128xf32> to vector<1x128xf32>
    %747 = vector.shape_cast %744 : vector<1x128xf32> to vector<1x1x128xf32>
    tpu.vector_store %arg4[%c12_72, %c0_73, %c0_74], %747 {strides = array<i32>} : memref<15x1x128xf32, #tpu.memory_space<vmem>>, vector<1x1x128xf32>,
    %748 = vector.broadcast %133 : f32 to vector<1x128xf32>
    %749 = arith.mulf %748, %538 : vector<1x128xf32>
    %750 = vector.broadcast %142 : f32 to vector<1x128xf32>
    %751 = arith.mulf %750, %549 : vector<1x128xf32>
    %752 = arith.addf %749, %751 : vector<1x128xf32>
    %753 = vector.broadcast %151 : f32 to vector<1x128xf32>
    %754 = arith.mulf %753, %560 : vector<1x128xf32>
    %755 = arith.addf %752, %754 : vector<1x128xf32>
    %756 = vector.broadcast %160 : f32 to vector<1x128xf32>
    %757 = arith.mulf %756, %571 : vector<1x128xf32>
    %758 = arith.addf %755, %757 : vector<1x128xf32>
    %759 = vector.broadcast %169 : f32 to vector<1x128xf32>
    %760 = arith.mulf %759, %582 : vector<1x128xf32>
    %761 = arith.addf %758, %760 : vector<1x128xf32>
    %762 = vector.broadcast %178 : f32 to vector<1x128xf32>
    %763 = arith.mulf %762, %593 : vector<1x128xf32>
    %764 = arith.addf %761, %763 : vector<1x128xf32>
    %765 = vector.broadcast %187 : f32 to vector<1x128xf32>
    %766 = arith.addf %764, %765 : vector<1x128xf32>
    %c13_75 = arith.constant 13 : index
    %c0_76 = arith.constant 0 : index
    %c0_77 = arith.constant 0 : index
    %767 = vector.load %arg4[%c13_75, %c0_76, %c0_77] : memref<15x1x128xf32, #tpu.memory_space<vmem>>, vector<1x1x128xf32>
    %768 = vector.shape_cast %767 : vector<1x1x128xf32> to vector<1x128xf32>
    %769 = vector.shape_cast %766 : vector<1x128xf32> to vector<1x1x128xf32>
    tpu.vector_store %arg4[%c13_75, %c0_76, %c0_77], %769 {strides = array<i32>} : memref<15x1x128xf32, #tpu.memory_space<vmem>>, vector<1x1x128xf32>,
    %770 = vector.broadcast %134 : f32 to vector<1x128xf32>
    %771 = arith.mulf %770, %538 : vector<1x128xf32>
    %772 = vector.broadcast %143 : f32 to vector<1x128xf32>
    %773 = arith.mulf %772, %549 : vector<1x128xf32>
    %774 = arith.addf %771, %773 : vector<1x128xf32>
    %775 = vector.broadcast %152 : f32 to vector<1x128xf32>
    %776 = arith.mulf %775, %560 : vector<1x128xf32>
    %777 = arith.addf %774, %776 : vector<1x128xf32>
    %778 = vector.broadcast %161 : f32 to vector<1x128xf32>
    %779 = arith.mulf %778, %571 : vector<1x128xf32>
    %780 = arith.addf %777, %779 : vector<1x128xf32>
    %781 = vector.broadcast %170 : f32 to vector<1x128xf32>
    %782 = arith.mulf %781, %582 : vector<1x128xf32>
    %783 = arith.addf %780, %782 : vector<1x128xf32>
    %784 = vector.broadcast %179 : f32 to vector<1x128xf32>
    %785 = arith.mulf %784, %593 : vector<1x128xf32>
    %786 = arith.addf %783, %785 : vector<1x128xf32>
    %787 = vector.broadcast %188 : f32 to vector<1x128xf32>
    %788 = arith.addf %786, %787 : vector<1x128xf32>
    %c14_78 = arith.constant 14 : index
    %c0_79 = arith.constant 0 : index
    %c0_80 = arith.constant 0 : index
    %789 = vector.load %arg4[%c14_78, %c0_79, %c0_80] : memref<15x1x128xf32, #tpu.memory_space<vmem>>, vector<1x1x128xf32>
    %790 = vector.shape_cast %789 : vector<1x1x128xf32> to vector<1x128xf32>
    %791 = vector.shape_cast %788 : vector<1x128xf32> to vector<1x1x128xf32>
    tpu.vector_store %arg4[%c14_78, %c0_79, %c0_80], %791 {strides = array<i32>} : memref<15x1x128xf32, #tpu.memory_space<vmem>>, vector<1x1x128xf32>,
    return
  }
  func.func @transform_0(%arg0: i32) -> i32 {
    %c0_i32 = arith.constant 0 : i32
    %c0_i32_0 = arith.constant 0 : i32
    return %c0_i32 : i32
  }
  func.func @transform_1(%arg0: i32) -> (i32, i32, i32) {
    %c0_i32 = arith.constant 0 : i32
    %c0_i32_0 = arith.constant 0 : i32
    %c0_i32_1 = arith.constant 0 : i32
    return %c0_i32, %arg0, %c0_i32_0 : i32, i32, i32
  }
  func.func @transform_2(%arg0: i32) -> (i32, i32, i32) {
    %c0_i32 = arith.constant 0 : i32
    %c0_i32_0 = arith.constant 0 : i32
    %c0_i32_1 = arith.constant 0 : i32
    return %c0_i32, %arg0, %c0_i32_0 : i32, i32, i32
  }
  func.func @transform_3(%arg0: i32) -> (i32, i32, i32) {
    %c0_i32 = arith.constant 0 : i32
    %c0_i32_0 = arith.constant 0 : i32
    %c0_i32_1 = arith.constant 0 : i32
    return %c0_i32, %arg0, %c0_i32_0 : i32, i32, i32
  }
}

</mosaic_0001>

<llo_original>
// kernel: tpu_custom_call.1
$region0: #{tpu_custom_call.1}
  #allocation0 [shape = 'u32[]', space=smem, size = 0x4, offset = 0x4, fixed_abs, tag = 'smem constant byte address 0x4 - core index']
  #allocation1 [shape = 'u32[144,128]{1,0:T(1,128)}', space=vmem, size = 0x12000, scoped, tag = 'internal scratch']
  %s0 = inlined_call_operand.hbm [shape: f32[189], index: 0, kind: input, shape index: {}]
  %s1 = inlined_call_operand.hbm [shape: f32[9,1,128], index: 1, kind: input, shape index: {}]
  %s2 = inlined_call_operand.vmem [shape: f32[3,1,128], index: 2, kind: input, shape index: {}]
  %s3 = inlined_call_operand.hbm [shape: f32[15,1,128], index: 3, kind: output, shape index: {}]
  %s4 = sld [smem:[#allocation0]]
  $region30: #{tpu_custom_call.1} parent=0
    _
  %s6 = ssub.s32 1, %s4
  %s7 = scalar_select 0, %s6, %s4
  $region1: #{tpu_custom_call.1} parent=0
    #allocation2 [shape = 'u8[1024]{0}', space=smem, size = 0x400, scoped, tag = 'input window, operand 0, single buffered']
    #allocation3 [shape = 's32[1]{0}', space=sflag, size = 0x4, scoped, tag = 'scoped memory for tpu_custom_call.1']
    #allocation4 [shape = 's32[1]{0}', space=sflag, size = 0x4, scoped, tag = 'scoped memory for tpu_custom_call.1']
    #allocation5 [shape = 's32[1]{0}', space=sflag, size = 0x4, scoped, tag = 'scoped memory for tpu_custom_call.1']
    #allocation6 [shape = 'u8[4608]{0}', space=vmem, size = 0x1400, scoped, tag = 'input window, operand 1, single buffered']
    #allocation7 [shape = 'u8[7680]{0}', space=vmem, size = 0x2000, scoped, tag = 'output window, operand 0, single buffered']
    %8 = vsyncpa [#allocation5], 0
    %9 = vsyncpa [#allocation3], 0
    %10 = vsyncpa [#allocation4], 0
    // Predicated region
    $region2: #{tpu_custom_call.1} parent=1 // pred_check
      _
    $region3: #{tpu_custom_call.1} parent=1 // pred_check_branch
      %12 = sbr.rel (0) target = $region5
    $region4: #{tpu_custom_call.1} parent=1 // pred_region
      %s14 = ssub.s32 32, 32
      %15 = vsyncadd [#allocation5], %s14
      %18 = dma.hbm_to_smem %s0, 32, [#allocation2], [#allocation5]
    $region5: #{tpu_custom_call.1} parent=1 // pred_fallthru
      _
    // Predicated region
    $region6: #{tpu_custom_call.1} parent=1 // pred_check
      _
    $region7: #{tpu_custom_call.1} parent=1 // pred_check_branch
      %20 = sbr.rel (0) target = $region9
    $region8: #{tpu_custom_call.1} parent=1 // pred_region
      %s22 = ssub.s32 144, 144
      %23 = vsyncadd [#allocation3], %s22
      %s24 = sshll.u32 [#allocation6], 4
      %s25 = int_to_ptr.vmem [resolvable:$true] %s24
      %30 = dma.hbm_to_vmem [thread:$0]  %s1, 144, %s25, [#allocation3], 16, 16, 1
    $region9: #{tpu_custom_call.1} parent=1 // pred_fallthru
      _
    // Predicated region
    $region10: #{tpu_custom_call.1} parent=1 // pred_check
      _
    $region11: #{tpu_custom_call.1} parent=1 // pred_check_branch
      %32 = sbr.rel (0) target = $region13
    $region12: #{tpu_custom_call.1} parent=1 // pred_region
      _
    $region13: #{tpu_custom_call.1} parent=1 // pred_fallthru
      _
    // Predicated region
    $region14: #{tpu_custom_call.1} parent=1 // pred_check
      _
    $region15: #{tpu_custom_call.1} parent=1 // pred_check_branch
      %34 = sbr.rel (0) target = $region17
    $region16: #{tpu_custom_call.1} parent=1 // pred_region
      %35 = dma.done [#allocation5], 32
    $region17: #{tpu_custom_call.1} parent=1 // pred_fallthru
      _
    // Predicated region
    $region18: #{tpu_custom_call.1} parent=1 // pred_check
      _
    $region19: #{tpu_custom_call.1} parent=1 // pred_check_branch
      %37 = sbr.rel (0) target = $region21
    $region20: #{tpu_custom_call.1} parent=1 // pred_region
      %38 = dma.done [#allocation3], 144
    $region21: #{tpu_custom_call.1} parent=1 // pred_fallthru
      _
    %39 = sfence
    %s40 = sld [smem:[#allocation2]]
    %s41 = sld [smem:[#allocation2 + $0x1]]
    %s42 = sld [smem:[#allocation2 + $0x2]]
    %s43 = sld [smem:[#allocation2 + $0x3]]
    %s44 = sld [smem:[#allocation2 + $0x4]]
    %s45 = sld [smem:[#allocation2 + $0x5]]
    %s46 = sld [smem:[#allocation2 + $0x6]]
    %s47 = sld [smem:[#allocation2 + $0x7]]
    %s48 = sld [smem:[#allocation2 + $0x8]]
    %s49 = sld [smem:[#allocation2 + $0x9]]
    %s50 = sld [smem:[#allocation2 + $0xa]]
    %s51 = sld [smem:[#allocation2 + $0xb]]
    %s52 = sld [smem:[#allocation2 + $0xc]]
    %s53 = sld [smem:[#allocation2 + $0xd]]
    %s54 = sld [smem:[#allocation2 + $0xe]]
    %s55 = sld [smem:[#allocation2 + $0xf]]
    %s56 = sld [smem:[#allocation2 + $0x10]]
    %s57 = sld [smem:[#allocation2 + $0x11]]
    %s58 = sld [smem:[#allocation2 + $0x12]]
    %s59 = sld [smem:[#allocation2 + $0x13]]
    %s60 = sld [smem:[#allocation2 + $0x14]]
    %s61 = sld [smem:[#allocation2 + $0x15]]
    %s62 = sld [smem:[#allocation2 + $0x16]]
    %s63 = sld [smem:[#allocation2 + $0x17]]
    %s64 = sld [smem:[#allocation2 + $0x18]]
    %s65 = sld [smem:[#allocation2 + $0x19]]
    %s66 = sld [smem:[#allocation2 + $0x1a]]
    %s67 = sld [smem:[#allocation2 + $0x1b]]
    %s68 = sld [smem:[#allocation2 + $0x1c]]
    %s69 = sld [smem:[#allocation2 + $0x1d]]
    %s70 = sld [smem:[#allocation2 + $0x1e]]
    %s71 = sld [smem:[#allocation2 + $0x1f]]
    %s72 = sld [smem:[#allocation2 + $0x20]]
    %s73 = sld [smem:[#allocation2 + $0x21]]
    %s74 = sld [smem:[#allocation2 + $0x22]]
    %s75 = sld [smem:[#allocation2 + $0x23]]
    %s76 = sld [smem:[#allocation2 + $0x24]]
    %s77 = sld [smem:[#allocation2 + $0x25]]
    %s78 = sld [smem:[#allocation2 + $0x26]]
    %s79 = sld [smem:[#allocation2 + $0x27]]
    %s80 = sld [smem:[#allocation2 + $0x28]]
    %s81 = sld [smem:[#allocation2 + $0x29]]
    %s82 = sld [smem:[#allocation2 + $0x2a]]
    %s83 = sld [smem:[#allocation2 + $0x2b]]
    %s84 = sld [smem:[#allocation2 + $0x2c]]
    %s85 = sld [smem:[#allocation2 + $0x2d]]
    %s86 = sld [smem:[#allocation2 + $0x2e]]
    %s87 = sld [smem:[#allocation2 + $0x2f]]
    %s88 = sld [smem:[#allocation2 + $0x30]]
    %s89 = sld [smem:[#allocation2 + $0x31]]
    %s90 = sld [smem:[#allocation2 + $0x32]]
    %s91 = sld [smem:[#allocation2 + $0x33]]
    %s92 = sld [smem:[#allocation2 + $0x34]]
    %s93 = sld [smem:[#allocation2 + $0x35]]
    %s94 = sld [smem:[#allocation2 + $0x36]]
    %s95 = sld [smem:[#allocation2 + $0x37]]
    %s96 = sld [smem:[#allocation2 + $0x38]]
    %s97 = sld [smem:[#allocation2 + $0x39]]
    %s98 = sld [smem:[#allocation2 + $0x3a]]
    %s99 = sld [smem:[#allocation2 + $0x3b]]
    %s100 = sld [smem:[#allocation2 + $0x3c]]
    %s101 = sld [smem:[#allocation2 + $0x3d]]
    %s102 = sld [smem:[#allocation2 + $0x3e]]
    %s103 = sld [smem:[#allocation2 + $0x3f]]
    %s104 = sld [smem:[#allocation2 + $0x40]]
    %s105 = sld [smem:[#allocation2 + $0x41]]
    %s106 = sld [smem:[#allocation2 + $0x42]]
    %s107 = sld [smem:[#allocation2 + $0x43]]
    %s108 = sld [smem:[#allocation2 + $0x44]]
    %s109 = sld [smem:[#allocation2 + $0x45]]
    %s110 = sld [smem:[#allocation2 + $0x46]]
    %s111 = sld [smem:[#allocation2 + $0x47]]
    %s112 = sld [smem:[#allocation2 + $0x48]]
    %s113 = sld [smem:[#allocation2 + $0x49]]
    %s114 = sld [smem:[#allocation2 + $0x4a]]
    %s115 = sld [smem:[#allocation2 + $0x4b]]
    %s116 = sld [smem:[#allocation2 + $0x4c]]
    %s117 = sld [smem:[#allocation2 + $0x4d]]
    %s118 = sld [smem:[#allocation2 + $0x4e]]
    %s119 = sld [smem:[#allocation2 + $0x4f]]
    %s120 = sld [smem:[#allocation2 + $0x50]]
    %s121 = sld [smem:[#allocation2 + $0x51]]
    %s122 = sld [smem:[#allocation2 + $0x52]]
    %s123 = sld [smem:[#allocation2 + $0x53]]
    %s124 = sld [smem:[#allocation2 + $0x54]]
    %s125 = sld [smem:[#allocation2 + $0x55]]
    %s126 = sld [smem:[#allocation2 + $0x56]]
    %s127 = sld [smem:[#allocation2 + $0x57]]
    %s128 = sld [smem:[#allocation2 + $0x58]]
    %s129 = sld [smem:[#allocation2 + $0x59]]
    %s130 = sld [smem:[#allocation2 + $0x5a]]
    %s131 = sld [smem:[#allocation2 + $0x5b]]
    %s132 = sld [smem:[#allocation2 + $0x5c]]
    %s133 = sld [smem:[#allocation2 + $0x5d]]
    %s134 = sld [smem:[#allocation2 + $0x5e]]
    %s135 = sld [smem:[#allocation2 + $0x5f]]
    %s136 = sld [smem:[#allocation2 + $0x60]]
    %s137 = sld [smem:[#allocation2 + $0x61]]
    %s138 = sld [smem:[#allocation2 + $0x62]]
    %s139 = sld [smem:[#allocation2 + $0x63]]
    %s140 = sld [smem:[#allocation2 + $0x64]]
    %s141 = sld [smem:[#allocation2 + $0x65]]
    %s142 = sld [smem:[#allocation2 + $0x66]]
    %s143 = sld [smem:[#allocation2 + $0x67]]
    %s144 = sld [smem:[#allocation2 + $0x68]]
    %s145 = sld [smem:[#allocation2 + $0x69]]
    %s146 = sld [smem:[#allocation2 + $0x6a]]
    %s147 = sld [smem:[#allocation2 + $0x6b]]
    %s148 = sld [smem:[#allocation2 + $0x6c]]
    %s149 = sld [smem:[#allocation2 + $0x6d]]
    %s150 = sld [smem:[#allocation2 + $0x6e]]
    %s151 = sld [smem:[#allocation2 + $0x6f]]
    %s152 = sld [smem:[#allocation2 + $0x70]]
    %s153 = sld [smem:[#allocation2 + $0x71]]
    %s154 = sld [smem:[#allocation2 + $0x72]]
    %s155 = sld [smem:[#allocation2 + $0x73]]
    %s156 = sld [smem:[#allocation2 + $0x74]]
    %s157 = sld [smem:[#allocation2 + $0x75]]
    %s158 = sld [smem:[#allocation2 + $0x76]]
    %s159 = sld [smem:[#allocation2 + $0x77]]
    %s160 = sld [smem:[#allocation2 + $0x78]]
    %s161 = sld [smem:[#allocation2 + $0x79]]
    %s162 = sld [smem:[#allocation2 + $0x7a]]
    %s163 = sld [smem:[#allocation2 + $0x7b]]
    %s164 = sld [smem:[#allocation2 + $0x7c]]
    %s165 = sld [smem:[#allocation2 + $0x7d]]
    %s166 = sld [smem:[#allocation2 + $0x7e]]
    %s167 = sld [smem:[#allocation2 + $0x7f]]
    %s168 = sld [smem:[#allocation2 + $0x80]]
    %s169 = sld [smem:[#allocation2 + $0x81]]
    %s170 = sld [smem:[#allocation2 + $0x82]]
    %s171 = sld [smem:[#allocation2 + $0x83]]
    %s172 = sld [smem:[#allocation2 + $0x84]]
    %s173 = sld [smem:[#allocation2 + $0x85]]
    %s174 = sld [smem:[#allocation2 + $0x86]]
    %s175 = sld [smem:[#allocation2 + $0x87]]
    %s176 = sld [smem:[#allocation2 + $0x88]]
    %s177 = sld [smem:[#allocation2 + $0x89]]
    %s178 = sld [smem:[#allocation2 + $0x8a]]
    %s179 = sld [smem:[#allocation2 + $0x8b]]
    %s180 = sld [smem:[#allocation2 + $0x8c]]
    %s181 = sld [smem:[#allocation2 + $0x8d]]
    %s182 = sld [smem:[#allocation2 + $0x8e]]
    %s183 = sld [smem:[#allocation2 + $0x8f]]
    %s184 = sld [smem:[#allocation2 + $0x90]]
    %s185 = sld [smem:[#allocation2 + $0x91]]
    %s186 = sld [smem:[#allocation2 + $0x92]]
    %s187 = sld [smem:[#allocation2 + $0x93]]
    %s188 = sld [smem:[#allocation2 + $0x94]]
    %s189 = sld [smem:[#allocation2 + $0x95]]
    %s190 = sld [smem:[#allocation2 + $0x96]]
    %s191 = sld [smem:[#allocation2 + $0x97]]
    %s192 = sld [smem:[#allocation2 + $0x98]]
    %s193 = sld [smem:[#allocation2 + $0x99]]
    %s194 = sld [smem:[#allocation2 + $0x9a]]
    %s195 = sld [smem:[#allocation2 + $0x9b]]
    %s196 = sld [smem:[#allocation2 + $0x9c]]
    %s197 = sld [smem:[#allocation2 + $0x9d]]
    %s198 = sld [smem:[#allocation2 + $0x9e]]
    %s199 = sld [smem:[#allocation2 + $0x9f]]
    %s200 = sld [smem:[#allocation2 + $0xa0]]
    %s201 = sld [smem:[#allocation2 + $0xa1]]
    %s202 = sld [smem:[#allocation2 + $0xa2]]
    %s203 = sld [smem:[#allocation2 + $0xa3]]
    %s204 = sld [smem:[#allocation2 + $0xa4]]
    %s205 = sld [smem:[#allocation2 + $0xa5]]
    %s206 = sld [smem:[#allocation2 + $0xa6]]
    %s207 = sld [smem:[#allocation2 + $0xa7]]
    %s208 = sld [smem:[#allocation2 + $0xa8]]
    %s209 = sld [smem:[#allocation2 + $0xa9]]
    %s210 = sld [smem:[#allocation2 + $0xaa]]
    %s211 = sld [smem:[#allocation2 + $0xab]]
    %s212 = sld [smem:[#allocation2 + $0xac]]
    %s213 = sld [smem:[#allocation2 + $0xad]]
    %s214 = sld [smem:[#allocation2 + $0xae]]
    %s215 = sld [smem:[#allocation2 + $0xaf]]
    %s216 = sld [smem:[#allocation2 + $0xb0]]
    %s217 = sld [smem:[#allocation2 + $0xb1]]
    %s218 = sld [smem:[#allocation2 + $0xb2]]
    %s219 = sld [smem:[#allocation2 + $0xb3]]
    %s220 = sld [smem:[#allocation2 + $0xb4]]
    %s221 = sld [smem:[#allocation2 + $0xb5]]
    %s222 = sld [smem:[#allocation2 + $0xb6]]
    %s223 = sld [smem:[#allocation2 + $0xb7]]
    %s224 = sld [smem:[#allocation2 + $0xb8]]
    %s225 = sld [smem:[#allocation2 + $0xb9]]
    %s226 = sld [smem:[#allocation2 + $0xba]]
    %s227 = sld [smem:[#allocation2 + $0xbb]]
    %s228 = sld [smem:[#allocation2 + $0xbc]]
    %v229 = vld [vmem:[#allocation6] sm:$0x1]
    %s230 = scalar_lea.vmem [#allocation6], 1
    %v231 = vld [vmem:[%s230] sm:$0x1]
    %s232 = scalar_lea.vmem [#allocation6], 2
    %v233 = vld [vmem:[%s232] sm:$0x1]
    %s234 = scalar_lea.vmem [#allocation6], 3
    %v235 = vld [vmem:[%s234] sm:$0x1]
    %s236 = scalar_lea.vmem [#allocation6], 4
    %v237 = vld [vmem:[%s236] sm:$0x1]
    %s238 = scalar_lea.vmem [#allocation6], 5
    %v239 = vld [vmem:[%s238] sm:$0x1]
    %s240 = scalar_lea.vmem [#allocation6], 6
    %v241 = vld [vmem:[%s240] sm:$0x1]
    %s242 = scalar_lea.vmem [#allocation6], 7
    %v243 = vld [vmem:[%s242] sm:$0x1]
    %s244 = scalar_lea.vmem [#allocation6], 8
    %v245 = vld [vmem:[%s244] sm:$0x1]
    %v246 = vstv %s40
    %v247 = vmul.f32 %v246, %v229
    %v248 = vstv %s46
    %v249 = vmul.f32 %v248, %v231
    %v250 = vadd.f32 %v247, %v249
    %v251 = vstv %s52
    %v252 = vmul.f32 %v251, %v233
    %v253 = vadd.f32 %v250, %v252
    %v254 = vstv %s58
    %v255 = vmul.f32 %v254, %v235
    %v256 = vadd.f32 %v253, %v255
    %v257 = vstv %s64
    %v258 = vmul.f32 %v257, %v237
    %v259 = vadd.f32 %v256, %v258
    %v260 = vstv %s70
    %v261 = vmul.f32 %v260, %v239
    %v262 = vadd.f32 %v259, %v261
    %v263 = vstv %s76
    %v264 = vmul.f32 %v263, %v241
    %v265 = vadd.f32 %v262, %v264
    %v266 = vstv %s82
    %v267 = vmul.f32 %v266, %v243
    %v268 = vadd.f32 %v265, %v267
    %v269 = vstv %s88
    %v270 = vmul.f32 %v269, %v245
    %v271 = vadd.f32 %v268, %v270
    %v272 = vstv %s94
    %v273 = vadd.f32 %v271, %v272
    %v274 = vtanh.pop %v273
    %v275 = vstv %s41
    %v276 = vmul.f32 %v275, %v229
    %v277 = vstv %s47
    %v278 = vmul.f32 %v277, %v231
    %v279 = vadd.f32 %v276, %v278
    %v280 = vstv %s53
    %v281 = vmul.f32 %v280, %v233
    %v282 = vadd.f32 %v279, %v281
    %v283 = vstv %s59
    %v284 = vmul.f32 %v283, %v235
    %v285 = vadd.f32 %v282, %v284
    %v286 = vstv %s65
    %v287 = vmul.f32 %v286, %v237
    %v288 = vadd.f32 %v285, %v287
    %v289 = vstv %s71
    %v290 = vmul.f32 %v289, %v239
    %v291 = vadd.f32 %v288, %v290
    %v292 = vstv %s77
    %v293 = vmul.f32 %v292, %v241
    %v294 = vadd.f32 %v291, %v293
    %v295 = vstv %s83
    %v296 = vmul.f32 %v295, %v243
    %v297 = vadd.f32 %v294, %v296
    %v298 = vstv %s89
    %v299 = vmul.f32 %v298, %v245
    %v300 = vadd.f32 %v297, %v299
    %v301 = vstv %s95
    %v302 = vadd.f32 %v300, %v301
    %v303 = vtanh.pop %v302
    %v304 = vstv %s42
    %v305 = vmul.f32 %v304, %v229
    %v306 = vstv %s48
    %v307 = vmul.f32 %v306, %v231
    %v308 = vadd.f32 %v305, %v307
    %v309 = vstv %s54
    %v310 = vmul.f32 %v309, %v233
    %v311 = vadd.f32 %v308, %v310
    %v312 = vstv %s60
    %v313 = vmul.f32 %v312, %v235
    %v314 = vadd.f32 %v311, %v313
    %v315 = vstv %s66
    %v316 = vmul.f32 %v315, %v237
    %v317 = vadd.f32 %v314, %v316
    %v318 = vstv %s72
    %v319 = vmul.f32 %v318, %v239
    %v320 = vadd.f32 %v317, %v319
    %v321 = vstv %s78
    %v322 = vmul.f32 %v321, %v241
    %v323 = vadd.f32 %v320, %v322
    %v324 = vstv %s84
    %v325 = vmul.f32 %v324, %v243
    %v326 = vadd.f32 %v323, %v325
    %v327 = vstv %s90
    %v328 = vmul.f32 %v327, %v245
    %v329 = vadd.f32 %v326, %v328
    %v330 = vstv %s96
    %v331 = vadd.f32 %v329, %v330
    %v332 = vtanh.pop %v331
    %v333 = vstv %s43
    %v334 = vmul.f32 %v333, %v229
    %v335 = vstv %s49
    %v336 = vmul.f32 %v335, %v231
    %v337 = vadd.f32 %v334, %v336
    %v338 = vstv %s55
    %v339 = vmul.f32 %v338, %v233
    %v340 = vadd.f32 %v337, %v339
    %v341 = vstv %s61
    %v342 = vmul.f32 %v341, %v235
    %v343 = vadd.f32 %v340, %v342
    %v344 = vstv %s67
    %v345 = vmul.f32 %v344, %v237
    %v346 = vadd.f32 %v343, %v345
    %v347 = vstv %s73
    %v348 = vmul.f32 %v347, %v239
    %v349 = vadd.f32 %v346, %v348
    %v350 = vstv %s79
    %v351 = vmul.f32 %v350, %v241
    %v352 = vadd.f32 %v349, %v351
    %v353 = vstv %s85
    %v354 = vmul.f32 %v353, %v243
    %v355 = vadd.f32 %v352, %v354
    %v356 = vstv %s91
    %v357 = vmul.f32 %v356, %v245
    %v358 = vadd.f32 %v355, %v357
    %v359 = vstv %s97
    %v360 = vadd.f32 %v358, %v359
    %v361 = vtanh.pop %v360
    %v362 = vstv %s44
    %v363 = vmul.f32 %v362, %v229
    %v364 = vstv %s50
    %v365 = vmul.f32 %v364, %v231
    %v366 = vadd.f32 %v363, %v365
    %v367 = vstv %s56
    %v368 = vmul.f32 %v367, %v233
    %v369 = vadd.f32 %v366, %v368
    %v370 = vstv %s62
    %v371 = vmul.f32 %v370, %v235
    %v372 = vadd.f32 %v369, %v371
    %v373 = vstv %s68
    %v374 = vmul.f32 %v373, %v237
    %v375 = vadd.f32 %v372, %v374
    %v376 = vstv %s74
    %v377 = vmul.f32 %v376, %v239
    %v378 = vadd.f32 %v375, %v377
    %v379 = vstv %s80
    %v380 = vmul.f32 %v379, %v241
    %v381 = vadd.f32 %v378, %v380
    %v382 = vstv %s86
    %v383 = vmul.f32 %v382, %v243
    %v384 = vadd.f32 %v381, %v383
    %v385 = vstv %s92
    %v386 = vmul.f32 %v385, %v245
    %v387 = vadd.f32 %v384, %v386
    %v388 = vstv %s98
    %v389 = vadd.f32 %v387, %v388
    %v390 = vtanh.pop %v389
    %v391 = vstv %s45
    %v392 = vmul.f32 %v391, %v229
    %v393 = vstv %s51
    %v394 = vmul.f32 %v393, %v231
    %v395 = vadd.f32 %v392, %v394
    %v396 = vstv %s57
    %v397 = vmul.f32 %v396, %v233
    %v398 = vadd.f32 %v395, %v397
    %v399 = vstv %s63
    %v400 = vmul.f32 %v399, %v235
    %v401 = vadd.f32 %v398, %v400
    %v402 = vstv %s69
    %v403 = vmul.f32 %v402, %v237
    %v404 = vadd.f32 %v401, %v403
    %v405 = vstv %s75
    %v406 = vmul.f32 %v405, %v239
    %v407 = vadd.f32 %v404, %v406
    %v408 = vstv %s81
    %v409 = vmul.f32 %v408, %v241
    %v410 = vadd.f32 %v407, %v409
    %v411 = vstv %s87
    %v412 = vmul.f32 %v411, %v243
    %v413 = vadd.f32 %v410, %v412
    %v414 = vstv %s93
    %v415 = vmul.f32 %v414, %v245
    %v416 = vadd.f32 %v413, %v415
    %v417 = vstv %s99
    %v418 = vadd.f32 %v416, %v417
    %v419 = vtanh.pop %v418
    %v420 = vstv %s100
    %v421 = vmul.f32 %v420, %v274
    %v422 = vstv %s121
    %v423 = vmul.f32 %v422, %v274
    %v424 = vstv %s103
    %v425 = vmul.f32 %v424, %v303
    %v426 = vadd.f32 %v421, %v425
    %v427 = vstv %s124
    %v428 = vmul.f32 %v427, %v303
    %v429 = vadd.f32 %v423, %v428
    %v430 = vstv %s106
    %v431 = vmul.f32 %v430, %v332
    %v432 = vadd.f32 %v426, %v431
    %v433 = vstv %s127
    %v434 = vmul.f32 %v433, %v332
    %v435 = vadd.f32 %v429, %v434
    %v436 = vstv %s109
    %v437 = vmul.f32 %v436, %v361
    %v438 = vadd.f32 %v432, %v437
    %v439 = vstv %s130
    %v440 = vmul.f32 %v439, %v361
    %v441 = vadd.f32 %v435, %v440
    %v442 = vstv %s112
    %v443 = vmul.f32 %v442, %v390
    %v444 = vadd.f32 %v438, %v443
    %v445 = vstv %s133
    %v446 = vmul.f32 %v445, %v390
    %v447 = vadd.f32 %v441, %v446
    %v448 = vstv %s115
    %v449 = vmul.f32 %v448, %v419
    %v450 = vadd.f32 %v444, %v449
    %v451 = vstv %s136
    %v452 = vmul.f32 %v451, %v419
    %v453 = vadd.f32 %v447, %v452
    %v454 = vstv %s118
    %v455 = vadd.f32 %v450, %v454
    %v456 = vstv %s139
    %v457 = vadd.f32 %v453, %v456
    %v458 = vmul.f32 %v457, 1.442695
    %v459 = vpow.pop %v458
    %460 = vst [vmem:[#allocation7] sm:$0x1] %v455
    %s461 = scalar_lea.vmem [#allocation7], 3
    %462 = vst [vmem:[%s461] sm:$0x1] %v459
    %v463 = vld [vmem:[%s2] sm:$0x1]
    %v464 = vmul.f32 %v459, %v463
    %v465 = vadd.f32 %v455, %v464
    %v466 = vstv %s101
    %v467 = vmul.f32 %v466, %v274
    %v468 = vstv %s122
    %v469 = vmul.f32 %v468, %v274
    %v470 = vstv %s104
    %v471 = vmul.f32 %v470, %v303
    %v472 = vadd.f32 %v467, %v471
    %v473 = vstv %s125
    %v474 = vmul.f32 %v473, %v303
    %v475 = vadd.f32 %v469, %v474
    %v476 = vstv %s107
    %v477 = vmul.f32 %v476, %v332
    %v478 = vadd.f32 %v472, %v477
    %v479 = vstv %s128
    %v480 = vmul.f32 %v479, %v332
    %v481 = vadd.f32 %v475, %v480
    %v482 = vstv %s110
    %v483 = vmul.f32 %v482, %v361
    %v484 = vadd.f32 %v478, %v483
    %v485 = vstv %s131
    %v486 = vmul.f32 %v485, %v361
    %v487 = vadd.f32 %v481, %v486
    %v488 = vstv %s113
    %v489 = vmul.f32 %v488, %v390
    %v490 = vadd.f32 %v484, %v489
    %v491 = vstv %s134
    %v492 = vmul.f32 %v491, %v390
    %v493 = vadd.f32 %v487, %v492
    %v494 = vstv %s116
    %v495 = vmul.f32 %v494, %v419
    %v496 = vadd.f32 %v490, %v495
    %v497 = vstv %s137
    %v498 = vmul.f32 %v497, %v419
    %v499 = vadd.f32 %v493, %v498
    %v500 = vstv %s119
    %v501 = vadd.f32 %v496, %v500
    %v502 = vstv %s140
    %v503 = vadd.f32 %v499, %v502
    %v504 = vmul.f32 %v503, 1.442695
    %v505 = vpow.pop %v504
    %s506 = scalar_lea.vmem [#allocation7], 1
    %507 = vst [vmem:[%s506] sm:$0x1] %v501
    %s508 = scalar_lea.vmem [#allocation7], 4
    %509 = vst [vmem:[%s508] sm:$0x1] %v505
    %s510 = scalar_lea.vmem %s2, 1
    %v511 = vld [vmem:[%s510] sm:$0x1]
    %v512 = vmul.f32 %v505, %v511
    %v513 = vadd.f32 %v501, %v512
    %v514 = vstv %s102
    %v515 = vmul.f32 %v514, %v274
    %v516 = vstv %s123
    %v517 = vmul.f32 %v516, %v274
    %v518 = vstv %s105
    %v519 = vmul.f32 %v518, %v303
    %v520 = vadd.f32 %v515, %v519
    %v521 = vstv %s126
    %v522 = vmul.f32 %v521, %v303
    %v523 = vadd.f32 %v517, %v522
    %v524 = vstv %s108
    %v525 = vmul.f32 %v524, %v332
    %v526 = vadd.f32 %v520, %v525
    %v527 = vstv %s129
    %v528 = vmul.f32 %v527, %v332
    %v529 = vadd.f32 %v523, %v528
    %v530 = vstv %s111
    %v531 = vmul.f32 %v530, %v361
    %v532 = vadd.f32 %v526, %v531
    %v533 = vstv %s132
    %v534 = vmul.f32 %v533, %v361
    %v535 = vadd.f32 %v529, %v534
    %v536 = vstv %s114
    %v537 = vmul.f32 %v536, %v390
    %v538 = vadd.f32 %v532, %v537
    %v539 = vstv %s135
    %v540 = vmul.f32 %v539, %v390
    %v541 = vadd.f32 %v535, %v540
    %v542 = vstv %s117
    %v543 = vmul.f32 %v542, %v419
    %v544 = vadd.f32 %v538, %v543
    %v545 = vstv %s138
    %v546 = vmul.f32 %v545, %v419
    %v547 = vadd.f32 %v541, %v546
    %v548 = vstv %s120
    %v549 = vadd.f32 %v544, %v548
    %v550 = vstv %s141
    %v551 = vadd.f32 %v547, %v550
    %v552 = vmul.f32 %v551, 1.442695
    %v553 = vpow.pop %v552
    %s554 = scalar_lea.vmem [#allocation7], 2
    %555 = vst [vmem:[%s554] sm:$0x1] %v549
    %s556 = scalar_lea.vmem [#allocation7], 5
    %557 = vst [vmem:[%s556] sm:$0x1] %v553
    %s558 = scalar_lea.vmem %s2, 2
    %v559 = vld [vmem:[%s558] sm:$0x1]
    %v560 = vmul.f32 %v553, %v559
    %v561 = vadd.f32 %v549, %v560
    %v562 = vstv %s142
    %v563 = vmul.f32 %v562, %v465
    %v564 = vstv %s148
    %v565 = vmul.f32 %v564, %v513
    %v566 = vadd.f32 %v563, %v565
    %v567 = vstv %s154
    %v568 = vmul.f32 %v567, %v561
    %v569 = vadd.f32 %v566, %v568
    %v570 = vstv %s160
    %v571 = vadd.f32 %v569, %v570
    %v572 = vtanh.pop %v571
    %v573 = vstv %s143
    %v574 = vmul.f32 %v573, %v465
    %v575 = vstv %s149
    %v576 = vmul.f32 %v575, %v513
    %v577 = vadd.f32 %v574, %v576
    %v578 = vstv %s155
    %v579 = vmul.f32 %v578, %v561
    %v580 = vadd.f32 %v577, %v579
    %v581 = vstv %s161
    %v582 = vadd.f32 %v580, %v581
    %v583 = vtanh.pop %v582
    %v584 = vstv %s144
    %v585 = vmul.f32 %v584, %v465
    %v586 = vstv %s150
    %v587 = vmul.f32 %v586, %v513
    %v588 = vadd.f32 %v585, %v587
    %v589 = vstv %s156
    %v590 = vmul.f32 %v589, %v561
    %v591 = vadd.f32 %v588, %v590
    %v592 = vstv %s162
    %v593 = vadd.f32 %v591, %v592
    %v594 = vtanh.pop %v593
    %v595 = vstv %s145
    %v596 = vmul.f32 %v595, %v465
    %v597 = vstv %s151
    %v598 = vmul.f32 %v597, %v513
    %v599 = vadd.f32 %v596, %v598
    %v600 = vstv %s157
    %v601 = vmul.f32 %v600, %v561
    %v602 = vadd.f32 %v599, %v601
    %v603 = vstv %s163
    %v604 = vadd.f32 %v602, %v603
    %v605 = vtanh.pop %v604
    %v606 = vstv %s146
    %v607 = vmul.f32 %v606, %v465
    %v608 = vstv %s152
    %v609 = vmul.f32 %v608, %v513
    %v610 = vadd.f32 %v607, %v609
    %v611 = vstv %s158
    %v612 = vmul.f32 %v611, %v561
    %v613 = vadd.f32 %v610, %v612
    %v614 = vstv %s164
    %v615 = vadd.f32 %v613, %v614
    %v616 = vtanh.pop %v615
    %v617 = vstv %s147
    %v618 = vmul.f32 %v617, %v465
    %v619 = vstv %s153
    %v620 = vmul.f32 %v619, %v513
    %v621 = vadd.f32 %v618, %v620
    %v622 = vstv %s159
    %v623 = vmul.f32 %v622, %v561
    %v624 = vadd.f32 %v621, %v623
    %v625 = vstv %s165
    %v626 = vadd.f32 %v624, %v625
    %v627 = vtanh.pop %v626
    %v628 = vstv %s166
    %v629 = vmul.f32 %v628, %v572
    %v630 = vstv %s175
    %v631 = vmul.f32 %v630, %v583
    %v632 = vadd.f32 %v629, %v631
    %v633 = vstv %s184
    %v634 = vmul.f32 %v633, %v594
    %v635 = vadd.f32 %v632, %v634
    %v636 = vstv %s193
    %v637 = vmul.f32 %v636, %v605
    %v638 = vadd.f32 %v635, %v637
    %v639 = vstv %s202
    %v640 = vmul.f32 %v639, %v616
    %v641 = vadd.f32 %v638, %v640
    %v642 = vstv %s211
    %v643 = vmul.f32 %v642, %v627
    %v644 = vadd.f32 %v641, %v643
    %v645 = vstv %s220
    %v646 = vadd.f32 %v644, %v645
    %s647 = scalar_lea.vmem [#allocation7], 6
    %648 = vst [vmem:[%s647] sm:$0x1] %v646
    %v649 = vstv %s167
    %v650 = vmul.f32 %v649, %v572
    %v651 = vstv %s176
    %v652 = vmul.f32 %v651, %v583
    %v653 = vadd.f32 %v650, %v652
    %v654 = vstv %s185
    %v655 = vmul.f32 %v654, %v594
    %v656 = vadd.f32 %v653, %v655
    %v657 = vstv %s194
    %v658 = vmul.f32 %v657, %v605
    %v659 = vadd.f32 %v656, %v658
    %v660 = vstv %s203
    %v661 = vmul.f32 %v660, %v616
    %v662 = vadd.f32 %v659, %v661
    %v663 = vstv %s212
    %v664 = vmul.f32 %v663, %v627
    %v665 = vadd.f32 %v662, %v664
    %v666 = vstv %s221
    %v667 = vadd.f32 %v665, %v666
    %s668 = scalar_lea.vmem [#allocation7], 7
    %669 = vst [vmem:[%s668] sm:$0x1] %v667
    %v670 = vstv %s168
    %v671 = vmul.f32 %v670, %v572
    %v672 = vstv %s177
    %v673 = vmul.f32 %v672, %v583
    %v674 = vadd.f32 %v671, %v673
    %v675 = vstv %s186
    %v676 = vmul.f32 %v675, %v594
    %v677 = vadd.f32 %v674, %v676
    %v678 = vstv %s195
    %v679 = vmul.f32 %v678, %v605
    %v680 = vadd.f32 %v677, %v679
    %v681 = vstv %s204
    %v682 = vmul.f32 %v681, %v616
    %v683 = vadd.f32 %v680, %v682
    %v684 = vstv %s213
    %v685 = vmul.f32 %v684, %v627
    %v686 = vadd.f32 %v683, %v685
    %v687 = vstv %s222
    %v688 = vadd.f32 %v686, %v687
    %s689 = scalar_lea.vmem [#allocation7], 8
    %690 = vst [vmem:[%s689] sm:$0x1] %v688
    %v691 = vstv %s169
    %v692 = vmul.f32 %v691, %v572
    %v693 = vstv %s178
    %v694 = vmul.f32 %v693, %v583
    %v695 = vadd.f32 %v692, %v694
    %v696 = vstv %s187
    %v697 = vmul.f32 %v696, %v594
    %v698 = vadd.f32 %v695, %v697
    %v699 = vstv %s196
    %v700 = vmul.f32 %v699, %v605
    %v701 = vadd.f32 %v698, %v700
    %v702 = vstv %s205
    %v703 = vmul.f32 %v702, %v616
    %v704 = vadd.f32 %v701, %v703
    %v705 = vstv %s214
    %v706 = vmul.f32 %v705, %v627
    %v707 = vadd.f32 %v704, %v706
    %v708 = vstv %s223
    %v709 = vadd.f32 %v707, %v708
    %s710 = scalar_lea.vmem [#allocation7], 9
    %711 = vst [vmem:[%s710] sm:$0x1] %v709
    %v712 = vstv %s170
    %v713 = vmul.f32 %v712, %v572
    %v714 = vstv %s179
    %v715 = vmul.f32 %v714, %v583
    %v716 = vadd.f32 %v713, %v715
    %v717 = vstv %s188
    %v718 = vmul.f32 %v717, %v594
    %v719 = vadd.f32 %v716, %v718
    %v720 = vstv %s197
    %v721 = vmul.f32 %v720, %v605
    %v722 = vadd.f32 %v719, %v721
    %v723 = vstv %s206
    %v724 = vmul.f32 %v723, %v616
    %v725 = vadd.f32 %v722, %v724
    %v726 = vstv %s215
    %v727 = vmul.f32 %v726, %v627
    %v728 = vadd.f32 %v725, %v727
    %v729 = vstv %s224
    %v730 = vadd.f32 %v728, %v729
    %s731 = scalar_lea.vmem [#allocation7], 10
    %732 = vst [vmem:[%s731] sm:$0x1] %v730
    %v733 = vstv %s171
    %v734 = vmul.f32 %v733, %v572
    %v735 = vstv %s180
    %v736 = vmul.f32 %v735, %v583
    %v737 = vadd.f32 %v734, %v736
    %v738 = vstv %s189
    %v739 = vmul.f32 %v738, %v594
    %v740 = vadd.f32 %v737, %v739
    %v741 = vstv %s198
    %v742 = vmul.f32 %v741, %v605
    %v743 = vadd.f32 %v740, %v742
    %v744 = vstv %s207
    %v745 = vmul.f32 %v744, %v616
    %v746 = vadd.f32 %v743, %v745
    %v747 = vstv %s216
    %v748 = vmul.f32 %v747, %v627
    %v749 = vadd.f32 %v746, %v748
    %v750 = vstv %s225
    %v751 = vadd.f32 %v749, %v750
    %s752 = scalar_lea.vmem [#allocation7], 11
    %753 = vst [vmem:[%s752] sm:$0x1] %v751
    %v754 = vstv %s172
    %v755 = vmul.f32 %v754, %v572
    %v756 = vstv %s181
    %v757 = vmul.f32 %v756, %v583
    %v758 = vadd.f32 %v755, %v757
    %v759 = vstv %s190
    %v760 = vmul.f32 %v759, %v594
    %v761 = vadd.f32 %v758, %v760
    %v762 = vstv %s199
    %v763 = vmul.f32 %v762, %v605
    %v764 = vadd.f32 %v761, %v763
    %v765 = vstv %s208
    %v766 = vmul.f32 %v765, %v616
    %v767 = vadd.f32 %v764, %v766
    %v768 = vstv %s217
    %v769 = vmul.f32 %v768, %v627
    %v770 = vadd.f32 %v767, %v769
    %v771 = vstv %s226
    %v772 = vadd.f32 %v770, %v771
    %s773 = scalar_lea.vmem [#allocation7], 12
    %774 = vst [vmem:[%s773] sm:$0x1] %v772
    %v775 = vstv %s173
    %v776 = vmul.f32 %v775, %v572
    %v777 = vstv %s182
    %v778 = vmul.f32 %v777, %v583
    %v779 = vadd.f32 %v776, %v778
    %v780 = vstv %s191
    %v781 = vmul.f32 %v780, %v594
    %v782 = vadd.f32 %v779, %v781
    %v783 = vstv %s200
    %v784 = vmul.f32 %v783, %v605
    %v785 = vadd.f32 %v782, %v784
    %v786 = vstv %s209
    %v787 = vmul.f32 %v786, %v616
    %v788 = vadd.f32 %v785, %v787
    %v789 = vstv %s218
    %v790 = vmul.f32 %v789, %v627
    %v791 = vadd.f32 %v788, %v790
    %v792 = vstv %s227
    %v793 = vadd.f32 %v791, %v792
    %s794 = scalar_lea.vmem [#allocation7], 13
    %795 = vst [vmem:[%s794] sm:$0x1] %v793
    %v796 = vstv %s174
    %v797 = vmul.f32 %v796, %v572
    %v798 = vstv %s183
    %v799 = vmul.f32 %v798, %v583
    %v800 = vadd.f32 %v797, %v799
    %v801 = vstv %s192
    %v802 = vmul.f32 %v801, %v594
    %v803 = vadd.f32 %v800, %v802
    %v804 = vstv %s201
    %v805 = vmul.f32 %v804, %v605
    %v806 = vadd.f32 %v803, %v805
    %v807 = vstv %s210
    %v808 = vmul.f32 %v807, %v616
    %v809 = vadd.f32 %v806, %v808
    %v810 = vstv %s219
    %v811 = vmul.f32 %v810, %v627
    %v812 = vadd.f32 %v809, %v811
    %v813 = vstv %s228
    %v814 = vadd.f32 %v812, %v813
    %s815 = scalar_lea.vmem [#allocation7], 14
    %816 = vst [vmem:[%s815] sm:$0x1] %v814
    // Predicated region
    $region22: #{tpu_custom_call.1} parent=1 // pred_check
      _
    $region23: #{tpu_custom_call.1} parent=1 // pred_check_branch
      %818 = sbr.rel (0) target = $region25
    $region24: #{tpu_custom_call.1} parent=1 // pred_region
      %s820 = ssub.s32 240, 240
      %821 = vsyncadd [#allocation4], %s820
      %s822 = sshll.u32 [#allocation7], 4
      %s823 = int_to_ptr.vmem [resolvable:$true] %s822
      %828 = dma.vmem_to_hbm [thread:$0]  %s823, 240, %s3, [#allocation4], 16, 16, 1
    $region25: #{tpu_custom_call.1} parent=1 // pred_fallthru
      _
    // Predicated region
    $region26: #{tpu_custom_call.1} parent=1 // pred_check
      _
    $region27: #{tpu_custom_call.1} parent=1 // pred_check_branch
      %830 = sbr.rel (0) target = $region29
    $region28: #{tpu_custom_call.1} parent=1 // pred_region
      %831 = dma.done [#allocation4], 240
    $region29: #{tpu_custom_call.1} parent=1 // pred_fallthru
      _
    %832 = vsyncpa [#allocation3], 1
    %833 = vsyncpa [#allocation4], 1
    %834 = vsyncpa [#allocation5], 1

</llo_original>
